<compile_context>
chip_gen: v7x
topology: tpu7x:2x2x1
jax: 0.10.0
libtpu: 0.0.40
codegen_flags: <defaults>
</compile_context>

<pallas_src>
import jax
import jax.numpy as jnp
import numpy as np
from jax.experimental import pallas as pl
from jax.experimental.pallas import tpu as pltpu


def _round_up(x, m):
    return ((x + m - 1) // m) * m


def _pick_tile_b(b_pad, max_tile_b):
    """Largest multiple-of-128 tile that divides b_pad and is <= max_tile_b."""
    if b_pad <= max_tile_b:
        return b_pad
    best = 128
    for t in range(128, max_tile_b + 1, 128):
        if b_pad % t == 0:
            best = t
    return best


def decoder_kernel(x_ref, w1_ref, b1_ref, w2_ref, b2_ref, o_ref):
    # x_ref : (tile_b, latent_dim)   -- batch on sublanes, features on lanes
    # w1_ref: (hidden, latent_dim)   -- PyTorch nn.Linear weight layout
    # b1_ref: (1, hidden)
    # w2_ref: (out_dim, hidden)
    # b2_ref: (1, out_dim)
    # o_ref : (tile_b, out_dim)
    x = x_ref[...]
    # h = x @ W1.T  (contract dim 1 of x with dim 1 of W1)
    h = jax.lax.dot_general(
        x, w1_ref[...], (((1,), (1,)), ((), ())),
        preferred_element_type=jnp.float32,
        precision=jax.lax.Precision.HIGHEST)
    h = jnp.maximum(h + b1_ref[...], 0.0)            # bias + ReLU (f32)
    # y = h @ W2.T
    y = jax.lax.dot_general(
        h, w2_ref[...], (((1,), (1,)), ((), ())),
        preferred_element_type=jnp.float32,
        precision=jax.lax.Precision.HIGHEST)
    o_ref[...] = (y + b2_ref[...]).astype(o_ref.dtype)


def decoder_forward(latent, w1, b1, w2, b2, *, max_tile_b=4096):
    """latent: (B, latent_dim) f32.
    w1: (hidden, latent_dim), b1: (hidden,), w2: (out_dim, hidden), b2: (out_dim,)
    in PyTorch nn.Linear parameter layout.  Returns (B, out_dim) f32."""
    B, latent_dim = latent.shape
    hidden = w1.shape[0]
    out_dim = w2.shape[0]

    # Pad the batch to a multiple of 128, then tile it (no padding past b_pad).
    b_pad = _round_up(max(B, 1), 128)
    tile_b = _pick_tile_b(b_pad, max_tile_b)
    num_tiles = b_pad // tile_b

    x = latent if b_pad == B else jnp.pad(latent, ((0, b_pad - B), (0, 0)))
    b1r = b1.reshape(1, hidden)
    b2r = b2.reshape(1, out_dim)

    flops = 2 * b_pad * (latent_dim * hidden + hidden * out_dim)
    bytes_accessed = 4 * (b_pad * latent_dim + b_pad * out_dim
                          + hidden * latent_dim + hidden
                          + out_dim * hidden + out_dim)

    out = pl.pallas_call(
        decoder_kernel,
        out_shape=jax.ShapeDtypeStruct((b_pad, out_dim), jnp.float32),
        grid=(num_tiles,),
        in_specs=[
            pl.BlockSpec((tile_b, latent_dim), lambda i: (i, 0)),  # x: tile batch
            pl.BlockSpec((hidden, latent_dim), lambda i: (0, 0)),  # W1: resident
            pl.BlockSpec((1, hidden), lambda i: (0, 0)),           # b1
            pl.BlockSpec((out_dim, hidden), lambda i: (0, 0)),     # W2
            pl.BlockSpec((1, out_dim), lambda i: (0, 0)),          # b2
        ],
        out_specs=pl.BlockSpec((tile_b, out_dim), lambda i: (i, 0)),
        compiler_params=pltpu.CompilerParams(
            dimension_semantics=("parallel",)),
        cost_estimate=pl.CostEstimate(
            flops=flops, transcendentals=0, bytes_accessed=bytes_accessed),
    )(x, w1, b1r, w2, b2r)

    return out[:B]


def init_decoder_params(key, latent_dim=7, hidden_neus=27, output_dim=40):
    """Matches Decoder.init_params(): weight ~ U(-1/sqrt(in), 1/sqrt(in)), bias = 0.
    Weights kept in PyTorch nn.Linear layout (out_features, in_features)."""
    k1, k2 = jax.random.split(key)
    bound1 = 1.0 / np.sqrt(latent_dim)
    bound2 = 1.0 / np.sqrt(hidden_neus)
    w1 = jax.random.uniform(k1, (hidden_neus, latent_dim), jnp.float32,
                            minval=-bound1, maxval=bound1)
    b1 = jnp.zeros((hidden_neus,), jnp.float32)
    w2 = jax.random.uniform(k2, (output_dim, hidden_neus), jnp.float32,
                            minval=-bound2, maxval=bound2)
    b2 = jnp.zeros((output_dim,), jnp.float32)
    return w1, b1, w2, b2


def _reference(latent, w1, b1, w2, b2):
    return jnp.maximum(latent @ w1.T + b1, 0.0) @ w2.T + b2


if __name__ == "__main__":
    key = jax.random.PRNGKey(0)
    k_params, k_in1, k_in2, k_b1, k_b2 = jax.random.split(key, 5)

    latent_dim, hidden_neus, output_dim = 7, 27, 40
    w1, b1, w2, b2 = init_decoder_params(k_params, latent_dim, hidden_neus, output_dim)

    # 1) Small batch (matches module usage); pads to one 128-row tile, grid=(1,).
    latent_small = jax.random.normal(k_in1, (8, latent_dim), jnp.float32)
    out_small = jax.block_until_ready(decoder_forward(latent_small, w1, b1, w2, b2))
    np.testing.assert_allclose(np.asarray(out_small),
                               np.asarray(_reference(latent_small, w1, b1, w2, b2)),
                               rtol=1e-5, atol=1e-5)
    assert out_small.shape == (8, output_dim)

    # 2) Larger, non-multiple batch: pads 700 -> 768, single block by default.
    latent_big = jax.random.normal(k_in2, (700, latent_dim), jnp.float32)
    out_big = jax.block_until_ready(decoder_forward(latent_big, w1, b1, w2, b2))
    np.testing.assert_allclose(np.asarray(out_big),
                               np.asarray(_reference(latent_big, w1, b1, w2, b2)),
                               rtol=1e-5, atol=1e-5)
    assert out_big.shape == (700, output_dim)

    # 3) Same batch with non-zero biases and a forced multi-step grid
    #    (768 / 256 = 3 steps) to exercise the pipelined path.
    b1_rand = 0.1 * jax.random.normal(k_b1, (hidden_neus,), jnp.float32)
    b2_rand = 0.1 * jax.random.normal(k_b2, (output_dim,), jnp.float32)
    out_tiled = jax.block_until_ready(
        decoder_forward(latent_big, w1, b1_rand, w2, b2_rand, max_tile_b=256))
    np.testing.assert_allclose(np.asarray(out_tiled),
                               np.asarray(_reference(latent_big, w1, b1_rand, w2, b2_rand)),
                               rtol=1e-5, atol=1e-5)

    print("KERNEL_OK")
</pallas_src>

<mosaic_0001>
module attributes {stable_mosaic.version = 11 : i64} {
  func.func @decoder_kernel(%arg0: i32, %arg1: memref<128x7xf32, #tpu.memory_space<vmem>>, %arg2: memref<27x7xf32, #tpu.memory_space<vmem>>, %arg3: memref<1x27xf32, #tpu.memory_space<vmem>>, %arg4: memref<40x27xf32, #tpu.memory_space<vmem>>, %arg5: memref<1x40xf32, #tpu.memory_space<vmem>>, %arg6: memref<128x40xf32, #tpu.memory_space<vmem>>) attributes {dimension_semantics = [#tpu.dimension_semantics<parallel>], iteration_bounds = array<i64: 1>, scalar_prefetch = 0 : i64, scratch_operands = 0 : i64, tpu.core_type = #tpu.core_type<tc>, window_params = [{transform_indices = @transform_0, window_bounds = array<i64: 128, 7>}, {pipeline_mode = #tpu.pipeline_mode<synchronous>, transform_indices = @transform_1, window_bounds = array<i64: 27, 7>}, {pipeline_mode = #tpu.pipeline_mode<synchronous>, transform_indices = @transform_2, window_bounds = array<i64: 1, 27>}, {pipeline_mode = #tpu.pipeline_mode<synchronous>, transform_indices = @transform_3, window_bounds = array<i64: 40, 27>}, {pipeline_mode = #tpu.pipeline_mode<synchronous>, transform_indices = @transform_4, window_bounds = array<i64: 1, 40>}, {transform_indices = @transform_5, window_bounds = array<i64: 128, 40>}]} {
    %c0 = arith.constant 0 : index
    %c0_0 = arith.constant 0 : index
    %0 = vector.load %arg1[%c0, %c0_0] : memref<128x7xf32, #tpu.memory_space<vmem>>, vector<128x7xf32>
    %c0_1 = arith.constant 0 : index
    %c0_2 = arith.constant 0 : index
    %1 = vector.load %arg2[%c0_1, %c0_2] : memref<27x7xf32, #tpu.memory_space<vmem>>, vector<27x7xf32>
    %cst = arith.constant dense<0.000000e+00> : vector<128x27xf32>
    %2 = tpu.matmul %0, %1, %cst {dimension_numbers = #tpu.dot_dimension_numbers<[1], [1], [0], [0], [0, 0, 1, 0], [], []>, precision = #tpu.contract_precision<fp32>} : vector<128x7xf32>, vector<27x7xf32>, vector<128x27xf32> -> vector<128x27xf32>
    %c0_3 = arith.constant 0 : index
    %c0_4 = arith.constant 0 : index
    %3 = vector.load %arg3[%c0_3, %c0_4] : memref<1x27xf32, #tpu.memory_space<vmem>>, vector<1x27xf32>
    %4 = vector.broadcast %3 : vector<1x27xf32> to vector<128x27xf32>
    %5 = arith.addf %2, %4 : vector<128x27xf32>
    %cst_5 = arith.constant 0.000000e+00 : f32
    %6 = vector.broadcast %cst_5 : f32 to vector<128x27xf32>
    %7 = arith.maximumf %5, %6 : vector<128x27xf32>
    %c0_6 = arith.constant 0 : index
    %c0_7 = arith.constant 0 : index
    %8 = vector.load %arg4[%c0_6, %c0_7] : memref<40x27xf32, #tpu.memory_space<vmem>>, vector<40x27xf32>
    %cst_8 = arith.constant dense<0.000000e+00> : vector<128x40xf32>
    %9 = tpu.matmul %7, %8, %cst_8 {dimension_numbers = #tpu.dot_dimension_numbers<[1], [1], [0], [0], [0, 0, 1, 0], [], []>, precision = #tpu.contract_precision<fp32>} : vector<128x27xf32>, vector<40x27xf32>, vector<128x40xf32> -> vector<128x40xf32>
    %c0_9 = arith.constant 0 : index
    %c0_10 = arith.constant 0 : index
    %10 = vector.load %arg5[%c0_9, %c0_10] : memref<1x40xf32, #tpu.memory_space<vmem>>, vector<1x40xf32>
    %11 = vector.broadcast %10 : vector<1x40xf32> to vector<128x40xf32>
    %12 = arith.addf %9, %11 : vector<128x40xf32>
    %c0_11 = arith.constant 0 : index
    %c0_12 = arith.constant 0 : index
    %13 = vector.load %arg6[%c0_11, %c0_12] : memref<128x40xf32, #tpu.memory_space<vmem>>, vector<128x40xf32>
    tpu.vector_store %arg6[%c0_11, %c0_12], %12 {strides = array<i32>} : memref<128x40xf32, #tpu.memory_space<vmem>>, vector<128x40xf32>,
    return
  }
  func.func @transform_0(%arg0: i32) -> (i32, i32) {
    %c0_i32 = arith.constant 0 : i32
    %c0_i32_0 = arith.constant 0 : i32
    return %arg0, %c0_i32 : i32, i32
  }
  func.func @transform_1(%arg0: i32) -> (i32, i32) {
    %c0_i32 = arith.constant 0 : i32
    %c0_i32_0 = arith.constant 0 : i32
    %c0_i32_1 = arith.constant 0 : i32
    return %c0_i32, %c0_i32_0 : i32, i32
  }
  func.func @transform_2(%arg0: i32) -> (i32, i32) {
    %c0_i32 = arith.constant 0 : i32
    %c0_i32_0 = arith.constant 0 : i32
    %c0_i32_1 = arith.constant 0 : i32
    return %c0_i32, %c0_i32_0 : i32, i32
  }
  func.func @transform_3(%arg0: i32) -> (i32, i32) {
    %c0_i32 = arith.constant 0 : i32
    %c0_i32_0 = arith.constant 0 : i32
    %c0_i32_1 = arith.constant 0 : i32
    return %c0_i32, %c0_i32_0 : i32, i32
  }
  func.func @transform_4(%arg0: i32) -> (i32, i32) {
    %c0_i32 = arith.constant 0 : i32
    %c0_i32_0 = arith.constant 0 : i32
    %c0_i32_1 = arith.constant 0 : i32
    return %c0_i32, %c0_i32_0 : i32, i32
  }
  func.func @transform_5(%arg0: i32) -> (i32, i32) {
    %c0_i32 = arith.constant 0 : i32
    %c0_i32_0 = arith.constant 0 : i32
    return %arg0, %c0_i32 : i32, i32
  }
}

</mosaic_0001>

<llo_original>
// kernel: tpu_custom_call.1
$region0: #{tpu_custom_call.1}
  #allocation0 [shape = 'u32[]', space=smem, size = 0x4, offset = 0x4, fixed_abs, tag = 'smem constant byte address 0x4 - core index']
  #allocation1 [shape = 'u32[144,128]{1,0:T(1,128)}', space=vmem, size = 0x12000, scoped, tag = 'internal scratch']
  %s0 = inlined_call_operand.vmem [shape: f32[128,7], index: 0, kind: input, shape index: {}]
  %s1 = inlined_call_operand.vmem [shape: f32[27,7], index: 1, kind: input, shape index: {}]
  %s2 = inlined_call_operand.vmem [shape: f32[1,27], index: 2, kind: input, shape index: {}]
  %s3 = inlined_call_operand.vmem [shape: f32[40,27], index: 3, kind: input, shape index: {}]
  %s4 = inlined_call_operand.vmem [shape: f32[1,40], index: 4, kind: input, shape index: {}]
  %s5 = inlined_call_operand.vmem [shape: f32[128,40], index: 5, kind: output, shape index: {}]
  %s6 = sld [smem:[#allocation0]]
  $region30: #{tpu_custom_call.1} parent=0
    _
  %s8 = ssub.s32 1, %s6
  %s9 = scalar_select 0, %s8, %s6
  // Predicated region
  $region2: #{tpu_custom_call.1} parent=0 // pred_check
    _
  $region3: #{tpu_custom_call.1} parent=0 // pred_check_branch
    %11 = sbr.rel (0) target = $region5
  $region4: #{tpu_custom_call.1} parent=0 // pred_region
    _
  $region5: #{tpu_custom_call.1} parent=0 // pred_fallthru
    _
  // Predicated region
  $region6: #{tpu_custom_call.1} parent=0 // pred_check
    _
  $region7: #{tpu_custom_call.1} parent=0 // pred_check_branch
    %13 = sbr.rel (0) target = $region9
  $region8: #{tpu_custom_call.1} parent=0 // pred_region
    _
  $region9: #{tpu_custom_call.1} parent=0 // pred_fallthru
    _
  // Predicated region
  $region10: #{tpu_custom_call.1} parent=0 // pred_check
    _
  $region11: #{tpu_custom_call.1} parent=0 // pred_check_branch
    %15 = sbr.rel (0) target = $region13
  $region12: #{tpu_custom_call.1} parent=0 // pred_region
    _
  $region13: #{tpu_custom_call.1} parent=0 // pred_fallthru
    _
  // Predicated region
  $region14: #{tpu_custom_call.1} parent=0 // pred_check
    _
  $region15: #{tpu_custom_call.1} parent=0 // pred_check_branch
    %17 = sbr.rel (0) target = $region17
  $region16: #{tpu_custom_call.1} parent=0 // pred_region
    _
  $region17: #{tpu_custom_call.1} parent=0 // pred_fallthru
    _
  // Predicated region
  $region18: #{tpu_custom_call.1} parent=0 // pred_check
    _
  $region19: #{tpu_custom_call.1} parent=0 // pred_check_branch
    %19 = sbr.rel (0) target = $region21
  $region20: #{tpu_custom_call.1} parent=0 // pred_region
    _
  $region21: #{tpu_custom_call.1} parent=0 // pred_fallthru
    _
  %v20 = vld [vmem:[%s0] sm:$0xff]
  %v21 = vld [vmem:[%s0 + $0x8] sm:$0xff]
  %v22 = vld [vmem:[%s0 + $0x10] sm:$0xff]
  %v23 = vld [vmem:[%s0 + $0x18] sm:$0xff]
  %v24 = vld [vmem:[%s0 + $0x20] sm:$0xff]
  %v25 = vld [vmem:[%s0 + $0x28] sm:$0xff]
  %v26 = vld [vmem:[%s0 + $0x30] sm:$0xff]
  %v27 = vld [vmem:[%s0 + $0x38] sm:$0xff]
  %v28 = vld [vmem:[%s0 + $0x40] sm:$0xff]
  %v29 = vld [vmem:[%s0 + $0x48] sm:$0xff]
  %v30 = vld [vmem:[%s0 + $0x50] sm:$0xff]
  %v31 = vld [vmem:[%s0 + $0x58] sm:$0xff]
  %v32 = vld [vmem:[%s0 + $0x60] sm:$0xff]
  %v33 = vld [vmem:[%s0 + $0x68] sm:$0xff]
  %v34 = vld [vmem:[%s0 + $0x70] sm:$0xff]
  %v35 = vld [vmem:[%s0 + $0x78] sm:$0xff]
  %v36 = vld [vmem:[%s1] sm:$0xff]
  %v37 = vld [vmem:[%s1 + $0x8] sm:$0xff]
  %v38 = vld [vmem:[%s1 + $0x10] sm:$0xff]
  %v39 = vld [vmem:[%s1 + $0x18] sm:$0x7]
  %v40 = vld [vmem:[%s2] sm:$0x1]
  %v42 = vlaneseq
  %v43 = vshrl.u32 %v42, 7
  %v44 = vsub.s32 0, %v43
  %v45 = vrot.slane %v40, %v44
  %vm47 = vcmask 56320
  %v49 = vsel %vm47, %v20, 0
  %v52 = vsel %vm47, %v21, 0
  %v55 = vsel %vm47, %v22, 0
  %v58 = vsel %vm47, %v23, 0
  %v61 = vsel %vm47, %v24, 0
  %v64 = vsel %vm47, %v25, 0
  %v67 = vsel %vm47, %v26, 0
  %v70 = vsel %vm47, %v27, 0
  %v73 = vsel %vm47, %v28, 0
  %v76 = vsel %vm47, %v29, 0
  %v79 = vsel %vm47, %v30, 0
  %v82 = vsel %vm47, %v31, 0
  %v85 = vsel %vm47, %v32, 0
  %v88 = vsel %vm47, %v33, 0
  %v91 = vsel %vm47, %v34, 0
  %v94 = vsel %vm47, %v35, 0
  %v97 = vsel %vm47, %v36, 0
  %v100 = vsel %vm47, %v37, 0
  %v103 = vsel %vm47, %v38, 0
  %v106 = vsel %vm47, %v39, 0
  %108 = vmatprep.subr.mxu0 0.0
  %v109 = vand.u32 %v97, 4294901760
  %110 = vmatpush1.xpose.msra.mxu0 %v109
  %111 = vmatprep.subr.mxu0 0.0
  %v112 = vand.u32 %v100, 4294901760
  %113 = vmatpush1.xpose.msra.mxu0 %v112
  %114 = vmatprep.subr.mxu0 0.0
  %v115 = vand.u32 %v103, 4294901760
  %116 = vmatpush1.xpose.msra.mxu0 %v115
  %117 = vmatprep.subr.mxu0 0.0
  %v118 = vand.u32 %v106, 4294901760
  %119 = vmatpush1.xpose.msra.mxu0 %v118
  %120 = vmatprep.subr.mxu0 0.0
  %121 = vmatpush1.xpose.msra.mxu0 0.0
  %122 = vmatprep.subr.mxu0 0.0
  %123 = vmatpush1.xpose.msra.mxu0 0.0
  %124 = vmatprep.subr.mxu0 0.0
  %125 = vmatpush1.xpose.msra.mxu0 0.0
  %126 = vmatprep.subr.mxu0 0.0
  %127 = vmatpush1.xpose.msra.mxu0 0.0
  %128 = vmatprep.subr.mxu0 0.0
  %129 = vmatpush1.xpose.msra.mxu0 0.0
  %130 = vmatprep.subr.mxu0 0.0
  %131 = vmatpush1.xpose.msra.mxu0 0.0
  %132 = vmatprep.subr.mxu0 0.0
  %133 = vmatpush1.xpose.msra.mxu0 0.0
  %134 = vmatprep.subr.mxu0 0.0
  %135 = vmatpush1.xpose.msra.mxu0 0.0
  %136 = vmatprep.subr.mxu0 0.0
  %137 = vmatpush1.xpose.msra.mxu0 0.0
  %138 = vmatprep.subr.mxu0 0.0
  %139 = vmatpush1.xpose.msra.mxu0 0.0
  %140 = vmatprep.subr.mxu0 0.0
  %141 = vmatpush1.xpose.msra.mxu0 0.0
  %142 = vmatprep.subr.mxu0 0.0
  %143 = vmatpush1.xpose.msra.mxu0 0.0
  %144 = vmatprep.subr.mxu0 0.0
  %145 = vmatpush1.xpose.msra.mxu0 0.0
  %146 = vmatprep.subr.mxu0 0.0
  %147 = vmatpush1.xpose.msra.mxu0 0.0
  %148 = vmatprep.subr.mxu0 0.0
  %149 = vmatpush1.xpose.msra.mxu0 0.0
  %150 = vmatprep.subr.mxu0 0.0
  %151 = vmatpush1.xpose.msra.mxu0 0.0
  %152 = vmatprep.subr.mxu0 0.0
  %153 = vmatpush1.xpose.msra.mxu0 0.0
  %154 = vmatprep.subr.mxu0 0.0
  %155 = vmatpush1.xpose.msra.mxu0 0.0
  %156 = vmatprep.subr.mxu0 0.0
  %157 = vmatpush1.xpose.msra.mxu0 0.0
  %158 = vmatprep.subr.mxu0 0.0
  %159 = vmatpush1.xpose.msra.mxu0 0.0
  %160 = vmatprep.subr.mxu0 0.0
  %161 = vmatpush1.xpose.msra.mxu0 0.0
  %162 = vmatprep.subr.mxu0 0.0
  %163 = vmatpush1.xpose.msra.mxu0 0.0
  %164 = vmatprep.subr.mxu0 0.0
  %165 = vmatpush1.xpose.msra.mxu0 0.0
  %166 = vmatprep.subr.mxu0 0.0
  %167 = vmatpush1.xpose.msra.mxu0 0.0
  %168 = vmatprep.subr.mxu0 0.0
  %169 = vmatpush1.xpose.msra.mxu0 0.0
  %170 = vmatprep.subr.mxu0 0.0
  %171 = vmatpush1.xpose.msra.mxu0 0.0
  %172 = vmatprep.subr.mxu0 0.0
  %173 = vmatpush1.xpose.msra.mxu0 0.0
  %174 = vmatprep.subr.mxu0 0.0
  %175 = vmatpush1.xpose.msra.mxu0 0.0
  %176 = vmatprep.mubr.f32.mxu0 0.0
  %v177 = vand.u32 %v49, 4294901760
  %v178 = vsub.f32 %v49, %v177
  %v179 = vand.u32 %v178, 4294901760
  %v180 = vsub.f32 %v178, %v179
  %v181 = vand.u32 %v180, 4294901760
  %182 = vmatmul.mubr.f32.gmra.mrb[0].mxu0 %v181
  %v183 = vpop.f32.mrb[0].mxu0
  %v184 = vadd.f32 %v45, %v183
  %v185 = vpop.f32.mrb[0].mxu0
  %186 = vmatprep.mubr.f32.mxu0 0.0
  %v187 = vand.u32 %v52, 4294901760
  %v188 = vsub.f32 %v52, %v187
  %v189 = vand.u32 %v188, 4294901760
  %v190 = vsub.f32 %v188, %v189
  %v191 = vand.u32 %v190, 4294901760
  %192 = vmatmul.mubr.f32.gmra.mrb[0].mxu0 %v191
  %v193 = vpop.f32.mrb[0].mxu0
  %v194 = vadd.f32 %v45, %v193
  %v195 = vpop.f32.mrb[0].mxu0
  %196 = vmatprep.mubr.f32.mxu0 0.0
  %v197 = vand.u32 %v55, 4294901760
  %v198 = vsub.f32 %v55, %v197
  %v199 = vand.u32 %v198, 4294901760
  %v200 = vsub.f32 %v198, %v199
  %v201 = vand.u32 %v200, 4294901760
  %202 = vmatmul.mubr.f32.gmra.mrb[0].mxu0 %v201
  %v203 = vpop.f32.mrb[0].mxu0
  %v204 = vadd.f32 %v45, %v203
  %v205 = vpop.f32.mrb[0].mxu0
  %206 = vmatprep.mubr.f32.mxu0 0.0
  %v207 = vand.u32 %v58, 4294901760
  %v208 = vsub.f32 %v58, %v207
  %v209 = vand.u32 %v208, 4294901760
  %v210 = vsub.f32 %v208, %v209
  %v211 = vand.u32 %v210, 4294901760
  %212 = vmatmul.mubr.f32.gmra.mrb[0].mxu0 %v211
  %v213 = vpop.f32.mrb[0].mxu0
  %v214 = vadd.f32 %v45, %v213
  %v215 = vpop.f32.mrb[0].mxu0
  %216 = vmatprep.mubr.f32.mxu0 0.0
  %v217 = vand.u32 %v61, 4294901760
  %v218 = vsub.f32 %v61, %v217
  %v219 = vand.u32 %v218, 4294901760
  %v220 = vsub.f32 %v218, %v219
  %v221 = vand.u32 %v220, 4294901760
  %222 = vmatmul.mubr.f32.gmra.mrb[0].mxu0 %v221
  %v223 = vpop.f32.mrb[0].mxu0
  %v224 = vadd.f32 %v45, %v223
  %v225 = vpop.f32.mrb[0].mxu0
  %226 = vmatprep.mubr.f32.mxu0 0.0
  %v227 = vand.u32 %v64, 4294901760
  %v228 = vsub.f32 %v64, %v227
  %v229 = vand.u32 %v228, 4294901760
  %v230 = vsub.f32 %v228, %v229
  %v231 = vand.u32 %v230, 4294901760
  %232 = vmatmul.mubr.f32.gmra.mrb[0].mxu0 %v231
  %v233 = vpop.f32.mrb[0].mxu0
  %v234 = vadd.f32 %v45, %v233
  %v235 = vpop.f32.mrb[0].mxu0
  %236 = vmatprep.mubr.f32.mxu0 0.0
  %v237 = vand.u32 %v67, 4294901760
  %v238 = vsub.f32 %v67, %v237
  %v239 = vand.u32 %v238, 4294901760
  %v240 = vsub.f32 %v238, %v239
  %v241 = vand.u32 %v240, 4294901760
  %242 = vmatmul.mubr.f32.gmra.mrb[0].mxu0 %v241
  %v243 = vpop.f32.mrb[0].mxu0
  %v244 = vadd.f32 %v45, %v243
  %v245 = vpop.f32.mrb[0].mxu0
  %246 = vmatprep.mubr.f32.mxu0 0.0
  %v247 = vand.u32 %v70, 4294901760
  %v248 = vsub.f32 %v70, %v247
  %v249 = vand.u32 %v248, 4294901760
  %v250 = vsub.f32 %v248, %v249
  %v251 = vand.u32 %v250, 4294901760
  %252 = vmatmul.mubr.f32.gmra.mrb[0].mxu0 %v251
  %v253 = vpop.f32.mrb[0].mxu0
  %v254 = vadd.f32 %v45, %v253
  %v255 = vpop.f32.mrb[0].mxu0
  %256 = vmatprep.mubr.f32.mxu0 0.0
  %v257 = vand.u32 %v73, 4294901760
  %v258 = vsub.f32 %v73, %v257
  %v259 = vand.u32 %v258, 4294901760
  %v260 = vsub.f32 %v258, %v259
  %v261 = vand.u32 %v260, 4294901760
  %262 = vmatmul.mubr.f32.gmra.mrb[0].mxu0 %v261
  %v263 = vpop.f32.mrb[0].mxu0
  %v264 = vadd.f32 %v45, %v263
  %v265 = vpop.f32.mrb[0].mxu0
  %266 = vmatprep.mubr.f32.mxu0 0.0
  %v267 = vand.u32 %v76, 4294901760
  %v268 = vsub.f32 %v76, %v267
  %v269 = vand.u32 %v268, 4294901760
  %v270 = vsub.f32 %v268, %v269
  %v271 = vand.u32 %v270, 4294901760
  %272 = vmatmul.mubr.f32.gmra.mrb[0].mxu0 %v271
  %v273 = vpop.f32.mrb[0].mxu0
  %v274 = vadd.f32 %v45, %v273
  %v275 = vpop.f32.mrb[0].mxu0
  %276 = vmatprep.mubr.f32.mxu0 0.0
  %v277 = vand.u32 %v79, 4294901760
  %v278 = vsub.f32 %v79, %v277
  %v279 = vand.u32 %v278, 4294901760
  %v280 = vsub.f32 %v278, %v279
  %v281 = vand.u32 %v280, 4294901760
  %282 = vmatmul.mubr.f32.gmra.mrb[0].mxu0 %v281
  %v283 = vpop.f32.mrb[0].mxu0
  %v284 = vadd.f32 %v45, %v283
  %v285 = vpop.f32.mrb[0].mxu0
  %286 = vmatprep.mubr.f32.mxu0 0.0
  %v287 = vand.u32 %v82, 4294901760
  %v288 = vsub.f32 %v82, %v287
  %v289 = vand.u32 %v288, 4294901760
  %v290 = vsub.f32 %v288, %v289
  %v291 = vand.u32 %v290, 4294901760
  %292 = vmatmul.mubr.f32.gmra.mrb[0].mxu0 %v291
  %v293 = vpop.f32.mrb[0].mxu0
  %v294 = vadd.f32 %v45, %v293
  %v295 = vpop.f32.mrb[0].mxu0
  %296 = vmatprep.mubr.f32.mxu0 0.0
  %v297 = vand.u32 %v85, 4294901760
  %v298 = vsub.f32 %v85, %v297
  %v299 = vand.u32 %v298, 4294901760
  %v300 = vsub.f32 %v298, %v299
  %v301 = vand.u32 %v300, 4294901760
  %302 = vmatmul.mubr.f32.gmra.mrb[0].mxu0 %v301
  %v303 = vpop.f32.mrb[0].mxu0
  %v304 = vadd.f32 %v45, %v303
  %v305 = vpop.f32.mrb[0].mxu0
  %306 = vmatprep.mubr.f32.mxu0 0.0
  %v307 = vand.u32 %v88, 4294901760
  %v308 = vsub.f32 %v88, %v307
  %v309 = vand.u32 %v308, 4294901760
  %v310 = vsub.f32 %v308, %v309
  %v311 = vand.u32 %v310, 4294901760
  %312 = vmatmul.mubr.f32.gmra.mrb[0].mxu0 %v311
  %v313 = vpop.f32.mrb[0].mxu0
  %v314 = vadd.f32 %v45, %v313
  %v315 = vpop.f32.mrb[0].mxu0
  %316 = vmatprep.mubr.f32.mxu0 0.0
  %v317 = vand.u32 %v91, 4294901760
  %v318 = vsub.f32 %v91, %v317
  %v319 = vand.u32 %v318, 4294901760
  %v320 = vsub.f32 %v318, %v319
  %v321 = vand.u32 %v320, 4294901760
  %322 = vmatmul.mubr.f32.gmra.mrb[0].mxu0 %v321
  %v323 = vpop.f32.mrb[0].mxu0
  %v324 = vadd.f32 %v45, %v323
  %v325 = vpop.f32.mrb[0].mxu0
  %326 = vmatprep.mubr.f32.mxu0 0.0
  %v327 = vand.u32 %v94, 4294901760
  %v328 = vsub.f32 %v94, %v327
  %v329 = vand.u32 %v328, 4294901760
  %v330 = vsub.f32 %v328, %v329
  %v331 = vand.u32 %v330, 4294901760
  %332 = vmatmul.mubr.f32.gmra.mrb[0].mxu0 %v331
  %v333 = vpop.f32.mrb[0].mxu0
  %v334 = vadd.f32 %v45, %v333
  %v335 = vpop.f32.mrb[0].mxu0
  %336 = vdwg.mxu0
  %337 = vmatprep.subr.mxu0 0.0
  %v338 = vand.u32 %v97, 4294901760
  %v339 = vsub.f32 %v97, %v338
  %v340 = vand.u32 %v339, 4294901760
  %v341 = vsub.f32 %v339, %v340
  %v342 = vand.u32 %v341, 4294901760
  %343 = vmatpush1.xpose.msra.mxu0 %v342
  %344 = vmatprep.subr.mxu0 0.0
  %v345 = vand.u32 %v100, 4294901760
  %v346 = vsub.f32 %v100, %v345
  %v347 = vand.u32 %v346, 4294901760
  %v348 = vsub.f32 %v346, %v347
  %v349 = vand.u32 %v348, 4294901760
  %350 = vmatpush1.xpose.msra.mxu0 %v349
  %351 = vmatprep.subr.mxu0 0.0
  %v352 = vand.u32 %v103, 4294901760
  %v353 = vsub.f32 %v103, %v352
  %v354 = vand.u32 %v353, 4294901760
  %v355 = vsub.f32 %v353, %v354
  %v356 = vand.u32 %v355, 4294901760
  %357 = vmatpush1.xpose.msra.mxu0 %v356
  %358 = vmatprep.subr.mxu0 0.0
  %v359 = vand.u32 %v106, 4294901760
  %v360 = vsub.f32 %v106, %v359
  %v361 = vand.u32 %v360, 4294901760
  %v362 = vsub.f32 %v360, %v361
  %v363 = vand.u32 %v362, 4294901760
  %364 = vmatpush1.xpose.msra.mxu0 %v363
  %365 = vmatprep.subr.mxu0 0.0
  %366 = vmatpush1.xpose.msra.mxu0 0.0
  %367 = vmatprep.subr.mxu0 0.0
  %368 = vmatpush1.xpose.msra.mxu0 0.0
  %369 = vmatprep.subr.mxu0 0.0
  %370 = vmatpush1.xpose.msra.mxu0 0.0
  %371 = vmatprep.subr.mxu0 0.0
  %372 = vmatpush1.xpose.msra.mxu0 0.0
  %373 = vmatprep.subr.mxu0 0.0
  %374 = vmatpush1.xpose.msra.mxu0 0.0
  %375 = vmatprep.subr.mxu0 0.0
  %376 = vmatpush1.xpose.msra.mxu0 0.0
  %377 = vmatprep.subr.mxu0 0.0
  %378 = vmatpush1.xpose.msra.mxu0 0.0
  %379 = vmatprep.subr.mxu0 0.0
  %380 = vmatpush1.xpose.msra.mxu0 0.0
  %381 = vmatprep.subr.mxu0 0.0
  %382 = vmatpush1.xpose.msra.mxu0 0.0
  %383 = vmatprep.subr.mxu0 0.0
  %384 = vmatpush1.xpose.msra.mxu0 0.0
  %385 = vmatprep.subr.mxu0 0.0
  %386 = vmatpush1.xpose.msra.mxu0 0.0
  %387 = vmatprep.subr.mxu0 0.0
  %388 = vmatpush1.xpose.msra.mxu0 0.0
  %389 = vmatprep.subr.mxu0 0.0
  %390 = vmatpush1.xpose.msra.mxu0 0.0
  %391 = vmatprep.subr.mxu0 0.0
  %392 = vmatpush1.xpose.msra.mxu0 0.0
  %393 = vmatprep.subr.mxu0 0.0
  %394 = vmatpush1.xpose.msra.mxu0 0.0
  %395 = vmatprep.subr.mxu0 0.0
  %396 = vmatpush1.xpose.msra.mxu0 0.0
  %397 = vmatprep.subr.mxu0 0.0
  %398 = vmatpush1.xpose.msra.mxu0 0.0
  %399 = vmatprep.subr.mxu0 0.0
  %400 = vmatpush1.xpose.msra.mxu0 0.0
  %401 = vmatprep.subr.mxu0 0.0
  %402 = vmatpush1.xpose.msra.mxu0 0.0
  %403 = vmatprep.subr.mxu0 0.0
  %404 = vmatpush1.xpose.msra.mxu0 0.0
  %405 = vmatprep.subr.mxu0 0.0
  %406 = vmatpush1.xpose.msra.mxu0 0.0
  %407 = vmatprep.subr.mxu0 0.0
  %408 = vmatpush1.xpose.msra.mxu0 0.0
  %409 = vmatprep.subr.mxu0 0.0
  %410 = vmatpush1.xpose.msra.mxu0 0.0
  %411 = vmatprep.subr.mxu0 0.0
  %412 = vmatpush1.xpose.msra.mxu0 0.0
  %413 = vmatprep.subr.mxu0 0.0
  %414 = vmatpush1.xpose.msra.mxu0 0.0
  %415 = vmatprep.subr.mxu0 0.0
  %416 = vmatpush1.xpose.msra.mxu0 0.0
  %417 = vmatprep.subr.mxu0 0.0
  %418 = vmatpush1.xpose.msra.mxu0 0.0
  %419 = vmatprep.subr.mxu0 0.0
  %420 = vmatpush1.xpose.msra.mxu0 0.0
  %421 = vmatprep.mubr.f32.mxu0 0.0
  %v422 = vand.u32 %v49, 4294901760
  %423 = vmatmul.mubr.f32.gmra.mrb[0].mxu0 %v422
  %v424 = vpop.f32.mrb[0].mxu0
  %v425 = vadd.f32 %v184, %v424
  %v426 = vpop.f32.mrb[0].mxu0
  %427 = vmatprep.mubr.f32.mxu0 0.0
  %v428 = vand.u32 %v52, 4294901760
  %429 = vmatmul.mubr.f32.gmra.mrb[0].mxu0 %v428
  %v430 = vpop.f32.mrb[0].mxu0
  %v431 = vadd.f32 %v194, %v430
  %v432 = vpop.f32.mrb[0].mxu0
  %433 = vmatprep.mubr.f32.mxu0 0.0
  %v434 = vand.u32 %v55, 4294901760
  %435 = vmatmul.mubr.f32.gmra.mrb[0].mxu0 %v434
  %v436 = vpop.f32.mrb[0].mxu0
  %v437 = vadd.f32 %v204, %v436
  %v438 = vpop.f32.mrb[0].mxu0
  %439 = vmatprep.mubr.f32.mxu0 0.0
  %v440 = vand.u32 %v58, 4294901760
  %441 = vmatmul.mubr.f32.gmra.mrb[0].mxu0 %v440
  %v442 = vpop.f32.mrb[0].mxu0
  %v443 = vadd.f32 %v214, %v442
  %v444 = vpop.f32.mrb[0].mxu0
  %445 = vmatprep.mubr.f32.mxu0 0.0
  %v446 = vand.u32 %v61, 4294901760
  %447 = vmatmul.mubr.f32.gmra.mrb[0].mxu0 %v446
  %v448 = vpop.f32.mrb[0].mxu0
  %v449 = vadd.f32 %v224, %v448
  %v450 = vpop.f32.mrb[0].mxu0
  %451 = vmatprep.mubr.f32.mxu0 0.0
  %v452 = vand.u32 %v64, 4294901760
  %453 = vmatmul.mubr.f32.gmra.mrb[0].mxu0 %v452
  %v454 = vpop.f32.mrb[0].mxu0
  %v455 = vadd.f32 %v234, %v454
  %v456 = vpop.f32.mrb[0].mxu0
  %457 = vmatprep.mubr.f32.mxu0 0.0
  %v458 = vand.u32 %v67, 4294901760
  %459 = vmatmul.mubr.f32.gmra.mrb[0].mxu0 %v458
  %v460 = vpop.f32.mrb[0].mxu0
  %v461 = vadd.f32 %v244, %v460
  %v462 = vpop.f32.mrb[0].mxu0
  %463 = vmatprep.mubr.f32.mxu0 0.0
  %v464 = vand.u32 %v70, 4294901760
  %465 = vmatmul.mubr.f32.gmra.mrb[0].mxu0 %v464
  %v466 = vpop.f32.mrb[0].mxu0
  %v467 = vadd.f32 %v254, %v466
  %v468 = vpop.f32.mrb[0].mxu0
  %469 = vmatprep.mubr.f32.mxu0 0.0
  %v470 = vand.u32 %v73, 4294901760
  %471 = vmatmul.mubr.f32.gmra.mrb[0].mxu0 %v470
  %v472 = vpop.f32.mrb[0].mxu0
  %v473 = vadd.f32 %v264, %v472
  %v474 = vpop.f32.mrb[0].mxu0
  %475 = vmatprep.mubr.f32.mxu0 0.0
  %v476 = vand.u32 %v76, 4294901760
  %477 = vmatmul.mubr.f32.gmra.mrb[0].mxu0 %v476
  %v478 = vpop.f32.mrb[0].mxu0
  %v479 = vadd.f32 %v274, %v478
  %v480 = vpop.f32.mrb[0].mxu0
  %481 = vmatprep.mubr.f32.mxu0 0.0
  %v482 = vand.u32 %v79, 4294901760
  %483 = vmatmul.mubr.f32.gmra.mrb[0].mxu0 %v482
  %v484 = vpop.f32.mrb[0].mxu0
  %v485 = vadd.f32 %v284, %v484
  %v486 = vpop.f32.mrb[0].mxu0
  %487 = vmatprep.mubr.f32.mxu0 0.0
  %v488 = vand.u32 %v82, 4294901760
  %489 = vmatmul.mubr.f32.gmra.mrb[0].mxu0 %v488
  %v490 = vpop.f32.mrb[0].mxu0
  %v491 = vadd.f32 %v294, %v490
  %v492 = vpop.f32.mrb[0].mxu0
  %493 = vmatprep.mubr.f32.mxu0 0.0
  %v494 = vand.u32 %v85, 4294901760
  %495 = vmatmul.mubr.f32.gmra.mrb[0].mxu0 %v494
  %v496 = vpop.f32.mrb[0].mxu0
  %v497 = vadd.f32 %v304, %v496
  %v498 = vpop.f32.mrb[0].mxu0
  %499 = vmatprep.mubr.f32.mxu0 0.0
  %v500 = vand.u32 %v88, 4294901760
  %501 = vmatmul.mubr.f32.gmra.mrb[0].mxu0 %v500
  %v502 = vpop.f32.mrb[0].mxu0
  %v503 = vadd.f32 %v314, %v502
  %v504 = vpop.f32.mrb[0].mxu0
  %505 = vmatprep.mubr.f32.mxu0 0.0
  %v506 = vand.u32 %v91, 4294901760
  %507 = vmatmul.mubr.f32.gmra.mrb[0].mxu0 %v506
  %v508 = vpop.f32.mrb[0].mxu0
  %v509 = vadd.f32 %v324, %v508
  %v510 = vpop.f32.mrb[0].mxu0
  %511 = vmatprep.mubr.f32.mxu0 0.0
  %v512 = vand.u32 %v94, 4294901760
  %513 = vmatmul.mubr.f32.gmra.mrb[0].mxu0 %v512
  %v514 = vpop.f32.mrb[0].mxu0
  %v515 = vadd.f32 %v334, %v514
  %v516 = vpop.f32.mrb[0].mxu0
  %517 = vdwg.mxu0
  %518 = vmatprep.subr.mxu0 0.0
  %v519 = vand.u32 %v97, 4294901760
  %v520 = vsub.f32 %v97, %v519
  %521 = vmatpush1.xpose.msra.mxu0 %v520
  %522 = vmatprep.subr.mxu0 0.0
  %v523 = vand.u32 %v100, 4294901760
  %v524 = vsub.f32 %v100, %v523
  %525 = vmatpush1.xpose.msra.mxu0 %v524
  %526 = vmatprep.subr.mxu0 0.0
  %v527 = vand.u32 %v103, 4294901760
  %v528 = vsub.f32 %v103, %v527
  %529 = vmatpush1.xpose.msra.mxu0 %v528
  %530 = vmatprep.subr.mxu0 0.0
  %v531 = vand.u32 %v106, 4294901760
  %v532 = vsub.f32 %v106, %v531
  %533 = vmatpush1.xpose.msra.mxu0 %v532
  %534 = vmatprep.subr.mxu0 0.0
  %535 = vmatpush1.xpose.msra.mxu0 0.0
  %536 = vmatprep.subr.mxu0 0.0
  %537 = vmatpush1.xpose.msra.mxu0 0.0
  %538 = vmatprep.subr.mxu0 0.0
  %539 = vmatpush1.xpose.msra.mxu0 0.0
  %540 = vmatprep.subr.mxu0 0.0
  %541 = vmatpush1.xpose.msra.mxu0 0.0
  %542 = vmatprep.subr.mxu0 0.0
  %543 = vmatpush1.xpose.msra.mxu0 0.0
  %544 = vmatprep.subr.mxu0 0.0
  %545 = vmatpush1.xpose.msra.mxu0 0.0
  %546 = vmatprep.subr.mxu0 0.0
  %547 = vmatpush1.xpose.msra.mxu0 0.0
  %548 = vmatprep.subr.mxu0 0.0
  %549 = vmatpush1.xpose.msra.mxu0 0.0
  %550 = vmatprep.subr.mxu0 0.0
  %551 = vmatpush1.xpose.msra.mxu0 0.0
  %552 = vmatprep.subr.mxu0 0.0
  %553 = vmatpush1.xpose.msra.mxu0 0.0
  %554 = vmatprep.subr.mxu0 0.0
  %555 = vmatpush1.xpose.msra.mxu0 0.0
  %556 = vmatprep.subr.mxu0 0.0
  %557 = vmatpush1.xpose.msra.mxu0 0.0
  %558 = vmatprep.subr.mxu0 0.0
  %559 = vmatpush1.xpose.msra.mxu0 0.0
  %560 = vmatprep.subr.mxu0 0.0
  %561 = vmatpush1.xpose.msra.mxu0 0.0
  %562 = vmatprep.subr.mxu0 0.0
  %563 = vmatpush1.xpose.msra.mxu0 0.0
  %564 = vmatprep.subr.mxu0 0.0
  %565 = vmatpush1.xpose.msra.mxu0 0.0
  %566 = vmatprep.subr.mxu0 0.0
  %567 = vmatpush1.xpose.msra.mxu0 0.0
  %568 = vmatprep.subr.mxu0 0.0
  %569 = vmatpush1.xpose.msra.mxu0 0.0
  %570 = vmatprep.subr.mxu0 0.0
  %571 = vmatpush1.xpose.msra.mxu0 0.0
  %572 = vmatprep.subr.mxu0 0.0
  %573 = vmatpush1.xpose.msra.mxu0 0.0
  %574 = vmatprep.subr.mxu0 0.0
  %575 = vmatpush1.xpose.msra.mxu0 0.0
  %576 = vmatprep.subr.mxu0 0.0
  %577 = vmatpush1.xpose.msra.mxu0 0.0
  %578 = vmatprep.subr.mxu0 0.0
  %579 = vmatpush1.xpose.msra.mxu0 0.0
  %580 = vmatprep.subr.mxu0 0.0
  %581 = vmatpush1.xpose.msra.mxu0 0.0
  %582 = vmatprep.subr.mxu0 0.0
  %583 = vmatpush1.xpose.msra.mxu0 0.0
  %584 = vmatprep.subr.mxu0 0.0
  %585 = vmatpush1.xpose.msra.mxu0 0.0
  %586 = vmatprep.subr.mxu0 0.0
  %587 = vmatpush1.xpose.msra.mxu0 0.0
  %588 = vmatprep.subr.mxu0 0.0
  %589 = vmatpush1.xpose.msra.mxu0 0.0
  %590 = vmatprep.mubr.f32.mxu0 0.0
  %v591 = vand.u32 %v49, 4294901760
  %v592 = vsub.f32 %v49, %v591
  %593 = vmatmul.mubr.f32.gmra.mrb[0].mxu0 %v592
  %v594 = vpop.f32.mrb[0].mxu0
  %v595 = vadd.f32 %v425, %v594
  %v596 = vpop.f32.mrb[0].mxu0
  %597 = vmatprep.mubr.f32.mxu0 0.0
  %v598 = vand.u32 %v52, 4294901760
  %v599 = vsub.f32 %v52, %v598
  %600 = vmatmul.mubr.f32.gmra.mrb[0].mxu0 %v599
  %v601 = vpop.f32.mrb[0].mxu0
  %v602 = vadd.f32 %v431, %v601
  %v603 = vpop.f32.mrb[0].mxu0
  %604 = vmatprep.mubr.f32.mxu0 0.0
  %v605 = vand.u32 %v55, 4294901760
  %v606 = vsub.f32 %v55, %v605
  %607 = vmatmul.mubr.f32.gmra.mrb[0].mxu0 %v606
  %v608 = vpop.f32.mrb[0].mxu0
  %v609 = vadd.f32 %v437, %v608
  %v610 = vpop.f32.mrb[0].mxu0
  %611 = vmatprep.mubr.f32.mxu0 0.0
  %v612 = vand.u32 %v58, 4294901760
  %v613 = vsub.f32 %v58, %v612
  %614 = vmatmul.mubr.f32.gmra.mrb[0].mxu0 %v613
  %v615 = vpop.f32.mrb[0].mxu0
  %v616 = vadd.f32 %v443, %v615
  %v617 = vpop.f32.mrb[0].mxu0
  %618 = vmatprep.mubr.f32.mxu0 0.0
  %v619 = vand.u32 %v61, 4294901760
  %v620 = vsub.f32 %v61, %v619
  %621 = vmatmul.mubr.f32.gmra.mrb[0].mxu0 %v620
  %v622 = vpop.f32.mrb[0].mxu0
  %v623 = vadd.f32 %v449, %v622
  %v624 = vpop.f32.mrb[0].mxu0
  %625 = vmatprep.mubr.f32.mxu0 0.0
  %v626 = vand.u32 %v64, 4294901760
  %v627 = vsub.f32 %v64, %v626
  %628 = vmatmul.mubr.f32.gmra.mrb[0].mxu0 %v627
  %v629 = vpop.f32.mrb[0].mxu0
  %v630 = vadd.f32 %v455, %v629
  %v631 = vpop.f32.mrb[0].mxu0
  %632 = vmatprep.mubr.f32.mxu0 0.0
  %v633 = vand.u32 %v67, 4294901760
  %v634 = vsub.f32 %v67, %v633
  %635 = vmatmul.mubr.f32.gmra.mrb[0].mxu0 %v634
  %v636 = vpop.f32.mrb[0].mxu0
  %v637 = vadd.f32 %v461, %v636
  %v638 = vpop.f32.mrb[0].mxu0
  %639 = vmatprep.mubr.f32.mxu0 0.0
  %v640 = vand.u32 %v70, 4294901760
  %v641 = vsub.f32 %v70, %v640
  %642 = vmatmul.mubr.f32.gmra.mrb[0].mxu0 %v641
  %v643 = vpop.f32.mrb[0].mxu0
  %v644 = vadd.f32 %v467, %v643
  %v645 = vpop.f32.mrb[0].mxu0
  %646 = vmatprep.mubr.f32.mxu0 0.0
  %v647 = vand.u32 %v73, 4294901760
  %v648 = vsub.f32 %v73, %v647
  %649 = vmatmul.mubr.f32.gmra.mrb[0].mxu0 %v648
  %v650 = vpop.f32.mrb[0].mxu0
  %v651 = vadd.f32 %v473, %v650
  %v652 = vpop.f32.mrb[0].mxu0
  %653 = vmatprep.mubr.f32.mxu0 0.0
  %v654 = vand.u32 %v76, 4294901760
  %v655 = vsub.f32 %v76, %v654
  %656 = vmatmul.mubr.f32.gmra.mrb[0].mxu0 %v655
  %v657 = vpop.f32.mrb[0].mxu0
  %v658 = vadd.f32 %v479, %v657
  %v659 = vpop.f32.mrb[0].mxu0
  %660 = vmatprep.mubr.f32.mxu0 0.0
  %v661 = vand.u32 %v79, 4294901760
  %v662 = vsub.f32 %v79, %v661
  %663 = vmatmul.mubr.f32.gmra.mrb[0].mxu0 %v662
  %v664 = vpop.f32.mrb[0].mxu0
  %v665 = vadd.f32 %v485, %v664
  %v666 = vpop.f32.mrb[0].mxu0
  %667 = vmatprep.mubr.f32.mxu0 0.0
  %v668 = vand.u32 %v82, 4294901760
  %v669 = vsub.f32 %v82, %v668
  %670 = vmatmul.mubr.f32.gmra.mrb[0].mxu0 %v669
  %v671 = vpop.f32.mrb[0].mxu0
  %v672 = vadd.f32 %v491, %v671
  %v673 = vpop.f32.mrb[0].mxu0
  %674 = vmatprep.mubr.f32.mxu0 0.0
  %v675 = vand.u32 %v85, 4294901760
  %v676 = vsub.f32 %v85, %v675
  %677 = vmatmul.mubr.f32.gmra.mrb[0].mxu0 %v676
  %v678 = vpop.f32.mrb[0].mxu0
  %v679 = vadd.f32 %v497, %v678
  %v680 = vpop.f32.mrb[0].mxu0
  %681 = vmatprep.mubr.f32.mxu0 0.0
  %v682 = vand.u32 %v88, 4294901760
  %v683 = vsub.f32 %v88, %v682
  %684 = vmatmul.mubr.f32.gmra.mrb[0].mxu0 %v683
  %v685 = vpop.f32.mrb[0].mxu0
  %v686 = vadd.f32 %v503, %v685
  %v687 = vpop.f32.mrb[0].mxu0
  %688 = vmatprep.mubr.f32.mxu0 0.0
  %v689 = vand.u32 %v91, 4294901760
  %v690 = vsub.f32 %v91, %v689
  %691 = vmatmul.mubr.f32.gmra.mrb[0].mxu0 %v690
  %v692 = vpop.f32.mrb[0].mxu0
  %v693 = vadd.f32 %v509, %v692
  %v694 = vpop.f32.mrb[0].mxu0
  %695 = vmatprep.mubr.f32.mxu0 0.0
  %v696 = vand.u32 %v94, 4294901760
  %v697 = vsub.f32 %v94, %v696
  %698 = vmatmul.mubr.f32.gmra.mrb[0].mxu0 %v697
  %v699 = vpop.f32.mrb[0].mxu0
  %v700 = vadd.f32 %v515, %v699
  %v701 = vpop.f32.mrb[0].mxu0
  %702 = vdwg.mxu0
  %703 = vmatprep.subr.mxu0 0.0
  %v704 = vand.u32 %v97, 4294901760
  %705 = vmatpush1.xpose.msra.mxu0 %v704
  %706 = vmatprep.subr.mxu0 0.0
  %v707 = vand.u32 %v100, 4294901760
  %708 = vmatpush1.xpose.msra.mxu0 %v707
  %709 = vmatprep.subr.mxu0 0.0
  %v710 = vand.u32 %v103, 4294901760
  %711 = vmatpush1.xpose.msra.mxu0 %v710
  %712 = vmatprep.subr.mxu0 0.0
  %v713 = vand.u32 %v106, 4294901760
  %714 = vmatpush1.xpose.msra.mxu0 %v713
  %715 = vmatprep.subr.mxu0 0.0
  %716 = vmatpush1.xpose.msra.mxu0 0.0
  %717 = vmatprep.subr.mxu0 0.0
  %718 = vmatpush1.xpose.msra.mxu0 0.0
  %719 = vmatprep.subr.mxu0 0.0
  %720 = vmatpush1.xpose.msra.mxu0 0.0
  %721 = vmatprep.subr.mxu0 0.0
  %722 = vmatpush1.xpose.msra.mxu0 0.0
  %723 = vmatprep.subr.mxu0 0.0
  %724 = vmatpush1.xpose.msra.mxu0 0.0
  %725 = vmatprep.subr.mxu0 0.0
  %726 = vmatpush1.xpose.msra.mxu0 0.0
  %727 = vmatprep.subr.mxu0 0.0
  %728 = vmatpush1.xpose.msra.mxu0 0.0
  %729 = vmatprep.subr.mxu0 0.0
  %730 = vmatpush1.xpose.msra.mxu0 0.0
  %731 = vmatprep.subr.mxu0 0.0
  %732 = vmatpush1.xpose.msra.mxu0 0.0
  %733 = vmatprep.subr.mxu0 0.0
  %734 = vmatpush1.xpose.msra.mxu0 0.0
  %735 = vmatprep.subr.mxu0 0.0
  %736 = vmatpush1.xpose.msra.mxu0 0.0
  %737 = vmatprep.subr.mxu0 0.0
  %738 = vmatpush1.xpose.msra.mxu0 0.0
  %739 = vmatprep.subr.mxu0 0.0
  %740 = vmatpush1.xpose.msra.mxu0 0.0
  %741 = vmatprep.subr.mxu0 0.0
  %742 = vmatpush1.xpose.msra.mxu0 0.0
  %743 = vmatprep.subr.mxu0 0.0
  %744 = vmatpush1.xpose.msra.mxu0 0.0
  %745 = vmatprep.subr.mxu0 0.0
  %746 = vmatpush1.xpose.msra.mxu0 0.0
  %747 = vmatprep.subr.mxu0 0.0
  %748 = vmatpush1.xpose.msra.mxu0 0.0
  %749 = vmatprep.subr.mxu0 0.0
  %750 = vmatpush1.xpose.msra.mxu0 0.0
  %751 = vmatprep.subr.mxu0 0.0
  %752 = vmatpush1.xpose.msra.mxu0 0.0
  %753 = vmatprep.subr.mxu0 0.0
  %754 = vmatpush1.xpose.msra.mxu0 0.0
  %755 = vmatprep.subr.mxu0 0.0
  %756 = vmatpush1.xpose.msra.mxu0 0.0
  %757 = vmatprep.subr.mxu0 0.0
  %758 = vmatpush1.xpose.msra.mxu0 0.0
  %759 = vmatprep.subr.mxu0 0.0
  %760 = vmatpush1.xpose.msra.mxu0 0.0
  %761 = vmatprep.subr.mxu0 0.0
  %762 = vmatpush1.xpose.msra.mxu0 0.0
  %763 = vmatprep.subr.mxu0 0.0
  %764 = vmatpush1.xpose.msra.mxu0 0.0
  %765 = vmatprep.subr.mxu0 0.0
  %766 = vmatpush1.xpose.msra.mxu0 0.0
  %767 = vmatprep.subr.mxu0 0.0
  %768 = vmatpush1.xpose.msra.mxu0 0.0
  %769 = vmatprep.subr.mxu0 0.0
  %770 = vmatpush1.xpose.msra.mxu0 0.0
  %771 = vmatprep.mubr.f32.mxu0 0.0
  %v772 = vand.u32 %v49, 4294901760
  %v773 = vsub.f32 %v49, %v772
  %v774 = vand.u32 %v773, 4294901760
  %775 = vmatmul.mubr.f32.gmra.mrb[0].mxu0 %v774
  %v776 = vpop.f32.mrb[0].mxu0
  %v777 = vadd.f32 %v595, %v776
  %v778 = vpop.f32.mrb[0].mxu0
  %779 = vmatprep.mubr.f32.mxu0 0.0
  %v780 = vand.u32 %v52, 4294901760
  %v781 = vsub.f32 %v52, %v780
  %v782 = vand.u32 %v781, 4294901760
  %783 = vmatmul.mubr.f32.gmra.mrb[0].mxu0 %v782
  %v784 = vpop.f32.mrb[0].mxu0
  %v785 = vadd.f32 %v602, %v784
  %v786 = vpop.f32.mrb[0].mxu0
  %787 = vmatprep.mubr.f32.mxu0 0.0
  %v788 = vand.u32 %v55, 4294901760
  %v789 = vsub.f32 %v55, %v788
  %v790 = vand.u32 %v789, 4294901760
  %791 = vmatmul.mubr.f32.gmra.mrb[0].mxu0 %v790
  %v792 = vpop.f32.mrb[0].mxu0
  %v793 = vadd.f32 %v609, %v792
  %v794 = vpop.f32.mrb[0].mxu0
  %795 = vmatprep.mubr.f32.mxu0 0.0
  %v796 = vand.u32 %v58, 4294901760
  %v797 = vsub.f32 %v58, %v796
  %v798 = vand.u32 %v797, 4294901760
  %799 = vmatmul.mubr.f32.gmra.mrb[0].mxu0 %v798
  %v800 = vpop.f32.mrb[0].mxu0
  %v801 = vadd.f32 %v616, %v800
  %v802 = vpop.f32.mrb[0].mxu0
  %803 = vmatprep.mubr.f32.mxu0 0.0
  %v804 = vand.u32 %v61, 4294901760
  %v805 = vsub.f32 %v61, %v804
  %v806 = vand.u32 %v805, 4294901760
  %807 = vmatmul.mubr.f32.gmra.mrb[0].mxu0 %v806
  %v808 = vpop.f32.mrb[0].mxu0
  %v809 = vadd.f32 %v623, %v808
  %v810 = vpop.f32.mrb[0].mxu0
  %811 = vmatprep.mubr.f32.mxu0 0.0
  %v812 = vand.u32 %v64, 4294901760
  %v813 = vsub.f32 %v64, %v812
  %v814 = vand.u32 %v813, 4294901760
  %815 = vmatmul.mubr.f32.gmra.mrb[0].mxu0 %v814
  %v816 = vpop.f32.mrb[0].mxu0
  %v817 = vadd.f32 %v630, %v816
  %v818 = vpop.f32.mrb[0].mxu0
  %819 = vmatprep.mubr.f32.mxu0 0.0
  %v820 = vand.u32 %v67, 4294901760
  %v821 = vsub.f32 %v67, %v820
  %v822 = vand.u32 %v821, 4294901760
  %823 = vmatmul.mubr.f32.gmra.mrb[0].mxu0 %v822
  %v824 = vpop.f32.mrb[0].mxu0
  %v825 = vadd.f32 %v637, %v824
  %v826 = vpop.f32.mrb[0].mxu0
  %827 = vmatprep.mubr.f32.mxu0 0.0
  %v828 = vand.u32 %v70, 4294901760
  %v829 = vsub.f32 %v70, %v828
  %v830 = vand.u32 %v829, 4294901760
  %831 = vmatmul.mubr.f32.gmra.mrb[0].mxu0 %v830
  %v832 = vpop.f32.mrb[0].mxu0
  %v833 = vadd.f32 %v644, %v832
  %v834 = vpop.f32.mrb[0].mxu0
  %835 = vmatprep.mubr.f32.mxu0 0.0
  %v836 = vand.u32 %v73, 4294901760
  %v837 = vsub.f32 %v73, %v836
  %v838 = vand.u32 %v837, 4294901760
  %839 = vmatmul.mubr.f32.gmra.mrb[0].mxu0 %v838
  %v840 = vpop.f32.mrb[0].mxu0
  %v841 = vadd.f32 %v651, %v840
  %v842 = vpop.f32.mrb[0].mxu0
  %843 = vmatprep.mubr.f32.mxu0 0.0
  %v844 = vand.u32 %v76, 4294901760
  %v845 = vsub.f32 %v76, %v844
  %v846 = vand.u32 %v845, 4294901760
  %847 = vmatmul.mubr.f32.gmra.mrb[0].mxu0 %v846
  %v848 = vpop.f32.mrb[0].mxu0
  %v849 = vadd.f32 %v658, %v848
  %v850 = vpop.f32.mrb[0].mxu0
  %851 = vmatprep.mubr.f32.mxu0 0.0
  %v852 = vand.u32 %v79, 4294901760
  %v853 = vsub.f32 %v79, %v852
  %v854 = vand.u32 %v853, 4294901760
  %855 = vmatmul.mubr.f32.gmra.mrb[0].mxu0 %v854
  %v856 = vpop.f32.mrb[0].mxu0
  %v857 = vadd.f32 %v665, %v856
  %v858 = vpop.f32.mrb[0].mxu0
  %859 = vmatprep.mubr.f32.mxu0 0.0
  %v860 = vand.u32 %v82, 4294901760
  %v861 = vsub.f32 %v82, %v860
  %v862 = vand.u32 %v861, 4294901760
  %863 = vmatmul.mubr.f32.gmra.mrb[0].mxu0 %v862
  %v864 = vpop.f32.mrb[0].mxu0
  %v865 = vadd.f32 %v672, %v864
  %v866 = vpop.f32.mrb[0].mxu0
  %867 = vmatprep.mubr.f32.mxu0 0.0
  %v868 = vand.u32 %v85, 4294901760
  %v869 = vsub.f32 %v85, %v868
  %v870 = vand.u32 %v869, 4294901760
  %871 = vmatmul.mubr.f32.gmra.mrb[0].mxu0 %v870
  %v872 = vpop.f32.mrb[0].mxu0
  %v873 = vadd.f32 %v679, %v872
  %v874 = vpop.f32.mrb[0].mxu0
  %875 = vmatprep.mubr.f32.mxu0 0.0
  %v876 = vand.u32 %v88, 4294901760
  %v877 = vsub.f32 %v88, %v876
  %v878 = vand.u32 %v877, 4294901760
  %879 = vmatmul.mubr.f32.gmra.mrb[0].mxu0 %v878
  %v880 = vpop.f32.mrb[0].mxu0
  %v881 = vadd.f32 %v686, %v880
  %v882 = vpop.f32.mrb[0].mxu0
  %883 = vmatprep.mubr.f32.mxu0 0.0
  %v884 = vand.u32 %v91, 4294901760
  %v885 = vsub.f32 %v91, %v884
  %v886 = vand.u32 %v885, 4294901760
  %887 = vmatmul.mubr.f32.gmra.mrb[0].mxu0 %v886
  %v888 = vpop.f32.mrb[0].mxu0
  %v889 = vadd.f32 %v693, %v888
  %v890 = vpop.f32.mrb[0].mxu0
  %891 = vmatprep.mubr.f32.mxu0 0.0
  %v892 = vand.u32 %v94, 4294901760
  %v893 = vsub.f32 %v94, %v892
  %v894 = vand.u32 %v893, 4294901760
  %895 = vmatmul.mubr.f32.gmra.mrb[0].mxu0 %v894
  %v896 = vpop.f32.mrb[0].mxu0
  %v897 = vadd.f32 %v700, %v896
  %v898 = vpop.f32.mrb[0].mxu0
  %899 = vdwg.mxu0
  %900 = vmatprep.subr.mxu0 0.0
  %v901 = vand.u32 %v97, 4294901760
  %v902 = vsub.f32 %v97, %v901
  %v903 = vand.u32 %v902, 4294901760
  %904 = vmatpush1.xpose.msra.mxu0 %v903
  %905 = vmatprep.subr.mxu0 0.0
  %v906 = vand.u32 %v100, 4294901760
  %v907 = vsub.f32 %v100, %v906
  %v908 = vand.u32 %v907, 4294901760
  %909 = vmatpush1.xpose.msra.mxu0 %v908
  %910 = vmatprep.subr.mxu0 0.0
  %v911 = vand.u32 %v103, 4294901760
  %v912 = vsub.f32 %v103, %v911
  %v913 = vand.u32 %v912, 4294901760
  %914 = vmatpush1.xpose.msra.mxu0 %v913
  %915 = vmatprep.subr.mxu0 0.0
  %v916 = vand.u32 %v106, 4294901760
  %v917 = vsub.f32 %v106, %v916
  %v918 = vand.u32 %v917, 4294901760
  %919 = vmatpush1.xpose.msra.mxu0 %v918
  %920 = vmatprep.subr.mxu0 0.0
  %921 = vmatpush1.xpose.msra.mxu0 0.0
  %922 = vmatprep.subr.mxu0 0.0
  %923 = vmatpush1.xpose.msra.mxu0 0.0
  %924 = vmatprep.subr.mxu0 0.0
  %925 = vmatpush1.xpose.msra.mxu0 0.0
  %926 = vmatprep.subr.mxu0 0.0
  %927 = vmatpush1.xpose.msra.mxu0 0.0
  %928 = vmatprep.subr.mxu0 0.0
  %929 = vmatpush1.xpose.msra.mxu0 0.0
  %930 = vmatprep.subr.mxu0 0.0
  %931 = vmatpush1.xpose.msra.mxu0 0.0
  %932 = vmatprep.subr.mxu0 0.0
  %933 = vmatpush1.xpose.msra.mxu0 0.0
  %934 = vmatprep.subr.mxu0 0.0
  %935 = vmatpush1.xpose.msra.mxu0 0.0
  %936 = vmatprep.subr.mxu0 0.0
  %937 = vmatpush1.xpose.msra.mxu0 0.0
  %938 = vmatprep.subr.mxu0 0.0
  %939 = vmatpush1.xpose.msra.mxu0 0.0
  %940 = vmatprep.subr.mxu0 0.0
  %941 = vmatpush1.xpose.msra.mxu0 0.0
  %942 = vmatprep.subr.mxu0 0.0
  %943 = vmatpush1.xpose.msra.mxu0 0.0
  %944 = vmatprep.subr.mxu0 0.0
  %945 = vmatpush1.xpose.msra.mxu0 0.0
  %946 = vmatprep.subr.mxu0 0.0
  %947 = vmatpush1.xpose.msra.mxu0 0.0
  %948 = vmatprep.subr.mxu0 0.0
  %949 = vmatpush1.xpose.msra.mxu0 0.0
  %950 = vmatprep.subr.mxu0 0.0
  %951 = vmatpush1.xpose.msra.mxu0 0.0
  %952 = vmatprep.subr.mxu0 0.0
  %953 = vmatpush1.xpose.msra.mxu0 0.0
  %954 = vmatprep.subr.mxu0 0.0
  %955 = vmatpush1.xpose.msra.mxu0 0.0
  %956 = vmatprep.subr.mxu0 0.0
  %957 = vmatpush1.xpose.msra.mxu0 0.0
  %958 = vmatprep.subr.mxu0 0.0
  %959 = vmatpush1.xpose.msra.mxu0 0.0
  %960 = vmatprep.subr.mxu0 0.0
  %961 = vmatpush1.xpose.msra.mxu0 0.0
  %962 = vmatprep.subr.mxu0 0.0
  %963 = vmatpush1.xpose.msra.mxu0 0.0
  %964 = vmatprep.subr.mxu0 0.0
  %965 = vmatpush1.xpose.msra.mxu0 0.0
  %966 = vmatprep.subr.mxu0 0.0
  %967 = vmatpush1.xpose.msra.mxu0 0.0
  %968 = vmatprep.subr.mxu0 0.0
  %969 = vmatpush1.xpose.msra.mxu0 0.0
  %970 = vmatprep.subr.mxu0 0.0
  %971 = vmatpush1.xpose.msra.mxu0 0.0
  %972 = vmatprep.subr.mxu0 0.0
  %973 = vmatpush1.xpose.msra.mxu0 0.0
  %974 = vmatprep.subr.mxu0 0.0
  %975 = vmatpush1.xpose.msra.mxu0 0.0
  %976 = vmatprep.mubr.f32.mxu0 0.0
  %v977 = vand.u32 %v49, 4294901760
  %978 = vmatmul.mubr.f32.gmra.mrb[0].mxu0 %v977
  %v979 = vpop.f32.mrb[0].mxu0
  %v980 = vadd.f32 %v777, %v979
  %v981 = vpop.f32.mrb[0].mxu0
  %982 = vmatprep.mubr.f32.mxu0 0.0
  %v983 = vand.u32 %v52, 4294901760
  %984 = vmatmul.mubr.f32.gmra.mrb[0].mxu0 %v983
  %v985 = vpop.f32.mrb[0].mxu0
  %v986 = vadd.f32 %v785, %v985
  %v987 = vpop.f32.mrb[0].mxu0
  %988 = vmatprep.mubr.f32.mxu0 0.0
  %v989 = vand.u32 %v55, 4294901760
  %990 = vmatmul.mubr.f32.gmra.mrb[0].mxu0 %v989
  %v991 = vpop.f32.mrb[0].mxu0
  %v992 = vadd.f32 %v793, %v991
  %v993 = vpop.f32.mrb[0].mxu0
  %994 = vmatprep.mubr.f32.mxu0 0.0
  %v995 = vand.u32 %v58, 4294901760
  %996 = vmatmul.mubr.f32.gmra.mrb[0].mxu0 %v995
  %v997 = vpop.f32.mrb[0].mxu0
  %v998 = vadd.f32 %v801, %v997
  %v999 = vpop.f32.mrb[0].mxu0
  %1000 = vmatprep.mubr.f32.mxu0 0.0
  %v1001 = vand.u32 %v61, 4294901760
  %1002 = vmatmul.mubr.f32.gmra.mrb[0].mxu0 %v1001
  %v1003 = vpop.f32.mrb[0].mxu0
  %v1004 = vadd.f32 %v809, %v1003
  %v1005 = vpop.f32.mrb[0].mxu0
  %1006 = vmatprep.mubr.f32.mxu0 0.0
  %v1007 = vand.u32 %v64, 4294901760
  %1008 = vmatmul.mubr.f32.gmra.mrb[0].mxu0 %v1007
  %v1009 = vpop.f32.mrb[0].mxu0
  %v1010 = vadd.f32 %v817, %v1009
  %v1011 = vpop.f32.mrb[0].mxu0
  %1012 = vmatprep.mubr.f32.mxu0 0.0
  %v1013 = vand.u32 %v67, 4294901760
  %1014 = vmatmul.mubr.f32.gmra.mrb[0].mxu0 %v1013
  %v1015 = vpop.f32.mrb[0].mxu0
  %v1016 = vadd.f32 %v825, %v1015
  %v1017 = vpop.f32.mrb[0].mxu0
  %1018 = vmatprep.mubr.f32.mxu0 0.0
  %v1019 = vand.u32 %v70, 4294901760
  %1020 = vmatmul.mubr.f32.gmra.mrb[0].mxu0 %v1019
  %v1021 = vpop.f32.mrb[0].mxu0
  %v1022 = vadd.f32 %v833, %v1021
  %v1023 = vpop.f32.mrb[0].mxu0
  %1024 = vmatprep.mubr.f32.mxu0 0.0
  %v1025 = vand.u32 %v73, 4294901760
  %1026 = vmatmul.mubr.f32.gmra.mrb[0].mxu0 %v1025
  %v1027 = vpop.f32.mrb[0].mxu0
  %v1028 = vadd.f32 %v841, %v1027
  %v1029 = vpop.f32.mrb[0].mxu0
  %1030 = vmatprep.mubr.f32.mxu0 0.0
  %v1031 = vand.u32 %v76, 4294901760
  %1032 = vmatmul.mubr.f32.gmra.mrb[0].mxu0 %v1031
  %v1033 = vpop.f32.mrb[0].mxu0
  %v1034 = vadd.f32 %v849, %v1033
  %v1035 = vpop.f32.mrb[0].mxu0
  %1036 = vmatprep.mubr.f32.mxu0 0.0
  %v1037 = vand.u32 %v79, 4294901760
  %1038 = vmatmul.mubr.f32.gmra.mrb[0].mxu0 %v1037
  %v1039 = vpop.f32.mrb[0].mxu0
  %v1040 = vadd.f32 %v857, %v1039
  %v1041 = vpop.f32.mrb[0].mxu0
  %1042 = vmatprep.mubr.f32.mxu0 0.0
  %v1043 = vand.u32 %v82, 4294901760
  %1044 = vmatmul.mubr.f32.gmra.mrb[0].mxu0 %v1043
  %v1045 = vpop.f32.mrb[0].mxu0
  %v1046 = vadd.f32 %v865, %v1045
  %v1047 = vpop.f32.mrb[0].mxu0
  %1048 = vmatprep.mubr.f32.mxu0 0.0
  %v1049 = vand.u32 %v85, 4294901760
  %1050 = vmatmul.mubr.f32.gmra.mrb[0].mxu0 %v1049
  %v1051 = vpop.f32.mrb[0].mxu0
  %v1052 = vadd.f32 %v873, %v1051
  %v1053 = vpop.f32.mrb[0].mxu0
  %1054 = vmatprep.mubr.f32.mxu0 0.0
  %v1055 = vand.u32 %v88, 4294901760
  %1056 = vmatmul.mubr.f32.gmra.mrb[0].mxu0 %v1055
  %v1057 = vpop.f32.mrb[0].mxu0
  %v1058 = vadd.f32 %v881, %v1057
  %v1059 = vpop.f32.mrb[0].mxu0
  %1060 = vmatprep.mubr.f32.mxu0 0.0
  %v1061 = vand.u32 %v91, 4294901760
  %1062 = vmatmul.mubr.f32.gmra.mrb[0].mxu0 %v1061
  %v1063 = vpop.f32.mrb[0].mxu0
  %v1064 = vadd.f32 %v889, %v1063
  %v1065 = vpop.f32.mrb[0].mxu0
  %1066 = vmatprep.mubr.f32.mxu0 0.0
  %v1067 = vand.u32 %v94, 4294901760
  %1068 = vmatmul.mubr.f32.gmra.mrb[0].mxu0 %v1067
  %v1069 = vpop.f32.mrb[0].mxu0
  %v1070 = vadd.f32 %v897, %v1069
  %v1071 = vpop.f32.mrb[0].mxu0
  %1072 = vdwg.mxu0
  %1073 = vmatprep.subr.mxu0 0.0
  %v1074 = vand.u32 %v97, 4294901760
  %1075 = vmatpush1.xpose.msra.mxu0 %v1074
  %1076 = vmatprep.subr.mxu0 0.0
  %v1077 = vand.u32 %v100, 4294901760
  %1078 = vmatpush1.xpose.msra.mxu0 %v1077
  %1079 = vmatprep.subr.mxu0 0.0
  %v1080 = vand.u32 %v103, 4294901760
  %1081 = vmatpush1.xpose.msra.mxu0 %v1080
  %1082 = vmatprep.subr.mxu0 0.0
  %v1083 = vand.u32 %v106, 4294901760
  %1084 = vmatpush1.xpose.msra.mxu0 %v1083
  %1085 = vmatprep.subr.mxu0 0.0
  %1086 = vmatpush1.xpose.msra.mxu0 0.0
  %1087 = vmatprep.subr.mxu0 0.0
  %1088 = vmatpush1.xpose.msra.mxu0 0.0
  %1089 = vmatprep.subr.mxu0 0.0
  %1090 = vmatpush1.xpose.msra.mxu0 0.0
  %1091 = vmatprep.subr.mxu0 0.0
  %1092 = vmatpush1.xpose.msra.mxu0 0.0
  %1093 = vmatprep.subr.mxu0 0.0
  %1094 = vmatpush1.xpose.msra.mxu0 0.0
  %1095 = vmatprep.subr.mxu0 0.0
  %1096 = vmatpush1.xpose.msra.mxu0 0.0
  %1097 = vmatprep.subr.mxu0 0.0
  %1098 = vmatpush1.xpose.msra.mxu0 0.0
  %1099 = vmatprep.subr.mxu0 0.0
  %1100 = vmatpush1.xpose.msra.mxu0 0.0
  %1101 = vmatprep.subr.mxu0 0.0
  %1102 = vmatpush1.xpose.msra.mxu0 0.0
  %1103 = vmatprep.subr.mxu0 0.0
  %1104 = vmatpush1.xpose.msra.mxu0 0.0
  %1105 = vmatprep.subr.mxu0 0.0
  %1106 = vmatpush1.xpose.msra.mxu0 0.0
  %1107 = vmatprep.subr.mxu0 0.0
  %1108 = vmatpush1.xpose.msra.mxu0 0.0
  %1109 = vmatprep.subr.mxu0 0.0
  %1110 = vmatpush1.xpose.msra.mxu0 0.0
  %1111 = vmatprep.subr.mxu0 0.0
  %1112 = vmatpush1.xpose.msra.mxu0 0.0
  %1113 = vmatprep.subr.mxu0 0.0
  %1114 = vmatpush1.xpose.msra.mxu0 0.0
  %1115 = vmatprep.subr.mxu0 0.0
  %1116 = vmatpush1.xpose.msra.mxu0 0.0
  %1117 = vmatprep.subr.mxu0 0.0
  %1118 = vmatpush1.xpose.msra.mxu0 0.0
  %1119 = vmatprep.subr.mxu0 0.0
  %1120 = vmatpush1.xpose.msra.mxu0 0.0
  %1121 = vmatprep.subr.mxu0 0.0
  %1122 = vmatpush1.xpose.msra.mxu0 0.0
  %1123 = vmatprep.subr.mxu0 0.0
  %1124 = vmatpush1.xpose.msra.mxu0 0.0
  %1125 = vmatprep.subr.mxu0 0.0
  %1126 = vmatpush1.xpose.msra.mxu0 0.0
  %1127 = vmatprep.subr.mxu0 0.0
  %1128 = vmatpush1.xpose.msra.mxu0 0.0
  %1129 = vmatprep.subr.mxu0 0.0
  %1130 = vmatpush1.xpose.msra.mxu0 0.0
  %1131 = vmatprep.subr.mxu0 0.0
  %1132 = vmatpush1.xpose.msra.mxu0 0.0
  %1133 = vmatprep.subr.mxu0 0.0
  %1134 = vmatpush1.xpose.msra.mxu0 0.0
  %1135 = vmatprep.subr.mxu0 0.0
  %1136 = vmatpush1.xpose.msra.mxu0 0.0
  %1137 = vmatprep.subr.mxu0 0.0
  %1138 = vmatpush1.xpose.msra.mxu0 0.0
  %1139 = vmatprep.subr.mxu0 0.0
  %1140 = vmatpush1.xpose.msra.mxu0 0.0
  %1141 = vmatprep.mubr.f32.mxu0 0.0
  %v1142 = vand.u32 %v49, 4294901760
  %1143 = vmatmul.mubr.f32.gmra.mrb[0].mxu0 %v1142
  %v1144 = vpop.f32.mrb[0].mxu0
  %v1145 = vadd.f32 %v980, %v1144
  %v1146 = vpop.f32.mrb[0].mxu0
  %1147 = vmatprep.mubr.f32.mxu0 0.0
  %v1148 = vand.u32 %v52, 4294901760
  %1149 = vmatmul.mubr.f32.gmra.mrb[0].mxu0 %v1148
  %v1150 = vpop.f32.mrb[0].mxu0
  %v1151 = vadd.f32 %v986, %v1150
  %v1152 = vpop.f32.mrb[0].mxu0
  %1153 = vmatprep.mubr.f32.mxu0 0.0
  %v1154 = vand.u32 %v55, 4294901760
  %1155 = vmatmul.mubr.f32.gmra.mrb[0].mxu0 %v1154
  %v1156 = vpop.f32.mrb[0].mxu0
  %v1157 = vadd.f32 %v992, %v1156
  %v1158 = vpop.f32.mrb[0].mxu0
  %1159 = vmatprep.mubr.f32.mxu0 0.0
  %v1160 = vand.u32 %v58, 4294901760
  %1161 = vmatmul.mubr.f32.gmra.mrb[0].mxu0 %v1160
  %v1162 = vpop.f32.mrb[0].mxu0
  %v1163 = vadd.f32 %v998, %v1162
  %v1164 = vpop.f32.mrb[0].mxu0
  %1165 = vmatprep.mubr.f32.mxu0 0.0
  %v1166 = vand.u32 %v61, 4294901760
  %1167 = vmatmul.mubr.f32.gmra.mrb[0].mxu0 %v1166
  %v1168 = vpop.f32.mrb[0].mxu0
  %v1169 = vadd.f32 %v1004, %v1168
  %v1170 = vpop.f32.mrb[0].mxu0
  %1171 = vmatprep.mubr.f32.mxu0 0.0
  %v1172 = vand.u32 %v64, 4294901760
  %1173 = vmatmul.mubr.f32.gmra.mrb[0].mxu0 %v1172
  %v1174 = vpop.f32.mrb[0].mxu0
  %v1175 = vadd.f32 %v1010, %v1174
  %v1176 = vpop.f32.mrb[0].mxu0
  %1177 = vmatprep.mubr.f32.mxu0 0.0
  %v1178 = vand.u32 %v67, 4294901760
  %1179 = vmatmul.mubr.f32.gmra.mrb[0].mxu0 %v1178
  %v1180 = vpop.f32.mrb[0].mxu0
  %v1181 = vadd.f32 %v1016, %v1180
  %v1182 = vpop.f32.mrb[0].mxu0
  %1183 = vmatprep.mubr.f32.mxu0 0.0
  %v1184 = vand.u32 %v70, 4294901760
  %1185 = vmatmul.mubr.f32.gmra.mrb[0].mxu0 %v1184
  %v1186 = vpop.f32.mrb[0].mxu0
  %v1187 = vadd.f32 %v1022, %v1186
  %v1188 = vpop.f32.mrb[0].mxu0
  %1189 = vmatprep.mubr.f32.mxu0 0.0
  %v1190 = vand.u32 %v73, 4294901760
  %1191 = vmatmul.mubr.f32.gmra.mrb[0].mxu0 %v1190
  %v1192 = vpop.f32.mrb[0].mxu0
  %v1193 = vadd.f32 %v1028, %v1192
  %v1194 = vpop.f32.mrb[0].mxu0
  %1195 = vmatprep.mubr.f32.mxu0 0.0
  %v1196 = vand.u32 %v76, 4294901760
  %1197 = vmatmul.mubr.f32.gmra.mrb[0].mxu0 %v1196
  %v1198 = vpop.f32.mrb[0].mxu0
  %v1199 = vadd.f32 %v1034, %v1198
  %v1200 = vpop.f32.mrb[0].mxu0
  %1201 = vmatprep.mubr.f32.mxu0 0.0
  %v1202 = vand.u32 %v79, 4294901760
  %1203 = vmatmul.mubr.f32.gmra.mrb[0].mxu0 %v1202
  %v1204 = vpop.f32.mrb[0].mxu0
  %v1205 = vadd.f32 %v1040, %v1204
  %v1206 = vpop.f32.mrb[0].mxu0
  %1207 = vmatprep.mubr.f32.mxu0 0.0
  %v1208 = vand.u32 %v82, 4294901760
  %1209 = vmatmul.mubr.f32.gmra.mrb[0].mxu0 %v1208
  %v1210 = vpop.f32.mrb[0].mxu0
  %v1211 = vadd.f32 %v1046, %v1210
  %v1212 = vpop.f32.mrb[0].mxu0
  %1213 = vmatprep.mubr.f32.mxu0 0.0
  %v1214 = vand.u32 %v85, 4294901760
  %1215 = vmatmul.mubr.f32.gmra.mrb[0].mxu0 %v1214
  %v1216 = vpop.f32.mrb[0].mxu0
  %v1217 = vadd.f32 %v1052, %v1216
  %v1218 = vpop.f32.mrb[0].mxu0
  %1219 = vmatprep.mubr.f32.mxu0 0.0
  %v1220 = vand.u32 %v88, 4294901760
  %1221 = vmatmul.mubr.f32.gmra.mrb[0].mxu0 %v1220
  %v1222 = vpop.f32.mrb[0].mxu0
  %v1223 = vadd.f32 %v1058, %v1222
  %v1224 = vpop.f32.mrb[0].mxu0
  %1225 = vmatprep.mubr.f32.mxu0 0.0
  %v1226 = vand.u32 %v91, 4294901760
  %1227 = vmatmul.mubr.f32.gmra.mrb[0].mxu0 %v1226
  %v1228 = vpop.f32.mrb[0].mxu0
  %v1229 = vadd.f32 %v1064, %v1228
  %v1230 = vpop.f32.mrb[0].mxu0
  %1231 = vmatprep.mubr.f32.mxu0 0.0
  %v1232 = vand.u32 %v94, 4294901760
  %1233 = vmatmul.mubr.f32.gmra.mrb[0].mxu0 %v1232
  %v1234 = vpop.f32.mrb[0].mxu0
  %v1235 = vadd.f32 %v1070, %v1234
  %v1236 = vpop.f32.mrb[0].mxu0
  %1237 = vdwg.mxu0
  %v1238 = vmax.f32 %v1145, 0.0
  %v1239 = vmax.f32 %v1151, 0.0
  %v1240 = vmax.f32 %v1157, 0.0
  %v1241 = vmax.f32 %v1163, 0.0
  %v1242 = vmax.f32 %v1169, 0.0
  %v1243 = vmax.f32 %v1175, 0.0
  %v1244 = vmax.f32 %v1181, 0.0
  %v1245 = vmax.f32 %v1187, 0.0
  %v1246 = vmax.f32 %v1193, 0.0
  %v1247 = vmax.f32 %v1199, 0.0
  %v1248 = vmax.f32 %v1205, 0.0
  %v1249 = vmax.f32 %v1211, 0.0
  %v1250 = vmax.f32 %v1217, 0.0
  %v1251 = vmax.f32 %v1223, 0.0
  %v1252 = vmax.f32 %v1229, 0.0
  %v1253 = vmax.f32 %v1235, 0.0
  %v1254 = vld [vmem:[%s3] sm:$0xff]
  %v1255 = vld [vmem:[%s3 + $0x8] sm:$0xff]
  %v1256 = vld [vmem:[%s3 + $0x10] sm:$0xff]
  %v1257 = vld [vmem:[%s3 + $0x18] sm:$0xff]
  %v1258 = vld [vmem:[%s3 + $0x20] sm:$0xff]
  %v1259 = vld [vmem:[%s4] sm:$0x1]
  %v1261 = vlaneseq
  %v1262 = vshrl.u32 %v1261, 7
  %v1263 = vsub.s32 0, %v1262
  %v1264 = vrot.slane %v1259, %v1263
  %vm1266 = vcmask 220160
  %v1268 = vsel %vm1266, %v1238, 0
  %v1271 = vsel %vm1266, %v1239, 0
  %v1274 = vsel %vm1266, %v1240, 0
  %v1277 = vsel %vm1266, %v1241, 0
  %v1280 = vsel %vm1266, %v1242, 0
  %v1283 = vsel %vm1266, %v1243, 0
  %v1286 = vsel %vm1266, %v1244, 0
  %v1289 = vsel %vm1266, %v1245, 0
  %v1292 = vsel %vm1266, %v1246, 0
  %v1295 = vsel %vm1266, %v1247, 0
  %v1298 = vsel %vm1266, %v1248, 0
  %v1301 = vsel %vm1266, %v1249, 0
  %v1304 = vsel %vm1266, %v1250, 0
  %v1307 = vsel %vm1266, %v1251, 0
  %v1310 = vsel %vm1266, %v1252, 0
  %v1313 = vsel %vm1266, %v1253, 0
  %v1316 = vsel %vm1266, %v1254, 0
  %v1319 = vsel %vm1266, %v1255, 0
  %v1322 = vsel %vm1266, %v1256, 0
  %v1325 = vsel %vm1266, %v1257, 0
  %v1328 = vsel %vm1266, %v1258, 0
  %1330 = vmatprep.subr.mxu0 0.0
  %v1331 = vand.u32 %v1316, 4294901760
  %1332 = vmatpush1.xpose.msra.mxu0 %v1331
  %1333 = vmatprep.subr.mxu0 0.0
  %v1334 = vand.u32 %v1319, 4294901760
  %1335 = vmatpush1.xpose.msra.mxu0 %v1334
  %1336 = vmatprep.subr.mxu0 0.0
  %v1337 = vand.u32 %v1322, 4294901760
  %1338 = vmatpush1.xpose.msra.mxu0 %v1337
  %1339 = vmatprep.subr.mxu0 0.0
  %v1340 = vand.u32 %v1325, 4294901760
  %1341 = vmatpush1.xpose.msra.mxu0 %v1340
  %1342 = vmatprep.subr.mxu0 0.0
  %v1343 = vand.u32 %v1328, 4294901760
  %1344 = vmatpush1.xpose.msra.mxu0 %v1343
  %1345 = vmatprep.subr.mxu0 0.0
  %1346 = vmatpush1.xpose.msra.mxu0 0.0
  %1347 = vmatprep.subr.mxu0 0.0
  %1348 = vmatpush1.xpose.msra.mxu0 0.0
  %1349 = vmatprep.subr.mxu0 0.0
  %1350 = vmatpush1.xpose.msra.mxu0 0.0
  %1351 = vmatprep.subr.mxu0 0.0
  %1352 = vmatpush1.xpose.msra.mxu0 0.0
  %1353 = vmatprep.subr.mxu0 0.0
  %1354 = vmatpush1.xpose.msra.mxu0 0.0
  %1355 = vmatprep.subr.mxu0 0.0
  %1356 = vmatpush1.xpose.msra.mxu0 0.0
  %1357 = vmatprep.subr.mxu0 0.0
  %1358 = vmatpush1.xpose.msra.mxu0 0.0
  %1359 = vmatprep.subr.mxu0 0.0
  %1360 = vmatpush1.xpose.msra.mxu0 0.0
  %1361 = vmatprep.subr.mxu0 0.0
  %1362 = vmatpush1.xpose.msra.mxu0 0.0
  %1363 = vmatprep.subr.mxu0 0.0
  %1364 = vmatpush1.xpose.msra.mxu0 0.0
  %1365 = vmatprep.subr.mxu0 0.0
  %1366 = vmatpush1.xpose.msra.mxu0 0.0
  %1367 = vmatprep.subr.mxu0 0.0
  %1368 = vmatpush1.xpose.msra.mxu0 0.0
  %1369 = vmatprep.subr.mxu0 0.0
  %1370 = vmatpush1.xpose.msra.mxu0 0.0
  %1371 = vmatprep.subr.mxu0 0.0
  %1372 = vmatpush1.xpose.msra.mxu0 0.0
  %1373 = vmatprep.subr.mxu0 0.0
  %1374 = vmatpush1.xpose.msra.mxu0 0.0
  %1375 = vmatprep.subr.mxu0 0.0
  %1376 = vmatpush1.xpose.msra.mxu0 0.0
  %1377 = vmatprep.subr.mxu0 0.0
  %1378 = vmatpush1.xpose.msra.mxu0 0.0
  %1379 = vmatprep.subr.mxu0 0.0
  %1380 = vmatpush1.xpose.msra.mxu0 0.0
  %1381 = vmatprep.subr.mxu0 0.0
  %1382 = vmatpush1.xpose.msra.mxu0 0.0
  %1383 = vmatprep.subr.mxu0 0.0
  %1384 = vmatpush1.xpose.msra.mxu0 0.0
  %1385 = vmatprep.subr.mxu0 0.0
  %1386 = vmatpush1.xpose.msra.mxu0 0.0
  %1387 = vmatprep.subr.mxu0 0.0
  %1388 = vmatpush1.xpose.msra.mxu0 0.0
  %1389 = vmatprep.subr.mxu0 0.0
  %1390 = vmatpush1.xpose.msra.mxu0 0.0
  %1391 = vmatprep.subr.mxu0 0.0
  %1392 = vmatpush1.xpose.msra.mxu0 0.0
  %1393 = vmatprep.subr.mxu0 0.0
  %1394 = vmatpush1.xpose.msra.mxu0 0.0
  %1395 = vmatprep.subr.mxu0 0.0
  %1396 = vmatpush1.xpose.msra.mxu0 0.0
  %1397 = vmatprep.subr.mxu0 0.0
  %1398 = vmatpush1.xpose.msra.mxu0 0.0
  %1399 = vmatprep.mubr.f32.mxu0 0.0
  %v1400 = vand.u32 %v1268, 4294901760
  %v1401 = vsub.f32 %v1268, %v1400
  %v1402 = vand.u32 %v1401, 4294901760
  %v1403 = vsub.f32 %v1401, %v1402
  %v1404 = vand.u32 %v1403, 4294901760
  %1405 = vmatmul.mubr.f32.gmra.mrb[0].mxu0 %v1404
  %v1406 = vpop.f32.mrb[0].mxu0
  %v1407 = vadd.f32 %v1264, %v1406
  %v1408 = vpop.f32.mrb[0].mxu0
  %1409 = vmatprep.mubr.f32.mxu0 0.0
  %v1410 = vand.u32 %v1271, 4294901760
  %v1411 = vsub.f32 %v1271, %v1410
  %v1412 = vand.u32 %v1411, 4294901760
  %v1413 = vsub.f32 %v1411, %v1412
  %v1414 = vand.u32 %v1413, 4294901760
  %1415 = vmatmul.mubr.f32.gmra.mrb[0].mxu0 %v1414
  %v1416 = vpop.f32.mrb[0].mxu0
  %v1417 = vadd.f32 %v1264, %v1416
  %v1418 = vpop.f32.mrb[0].mxu0
  %1419 = vmatprep.mubr.f32.mxu0 0.0
  %v1420 = vand.u32 %v1274, 4294901760
  %v1421 = vsub.f32 %v1274, %v1420
  %v1422 = vand.u32 %v1421, 4294901760
  %v1423 = vsub.f32 %v1421, %v1422
  %v1424 = vand.u32 %v1423, 4294901760
  %1425 = vmatmul.mubr.f32.gmra.mrb[0].mxu0 %v1424
  %v1426 = vpop.f32.mrb[0].mxu0
  %v1427 = vadd.f32 %v1264, %v1426
  %v1428 = vpop.f32.mrb[0].mxu0
  %1429 = vmatprep.mubr.f32.mxu0 0.0
  %v1430 = vand.u32 %v1277, 4294901760
  %v1431 = vsub.f32 %v1277, %v1430
  %v1432 = vand.u32 %v1431, 4294901760
  %v1433 = vsub.f32 %v1431, %v1432
  %v1434 = vand.u32 %v1433, 4294901760
  %1435 = vmatmul.mubr.f32.gmra.mrb[0].mxu0 %v1434
  %v1436 = vpop.f32.mrb[0].mxu0
  %v1437 = vadd.f32 %v1264, %v1436
  %v1438 = vpop.f32.mrb[0].mxu0
  %1439 = vmatprep.mubr.f32.mxu0 0.0
  %v1440 = vand.u32 %v1280, 4294901760
  %v1441 = vsub.f32 %v1280, %v1440
  %v1442 = vand.u32 %v1441, 4294901760
  %v1443 = vsub.f32 %v1441, %v1442
  %v1444 = vand.u32 %v1443, 4294901760
  %1445 = vmatmul.mubr.f32.gmra.mrb[0].mxu0 %v1444
  %v1446 = vpop.f32.mrb[0].mxu0
  %v1447 = vadd.f32 %v1264, %v1446
  %v1448 = vpop.f32.mrb[0].mxu0
  %1449 = vmatprep.mubr.f32.mxu0 0.0
  %v1450 = vand.u32 %v1283, 4294901760
  %v1451 = vsub.f32 %v1283, %v1450
  %v1452 = vand.u32 %v1451, 4294901760
  %v1453 = vsub.f32 %v1451, %v1452
  %v1454 = vand.u32 %v1453, 4294901760
  %1455 = vmatmul.mubr.f32.gmra.mrb[0].mxu0 %v1454
  %v1456 = vpop.f32.mrb[0].mxu0
  %v1457 = vadd.f32 %v1264, %v1456
  %v1458 = vpop.f32.mrb[0].mxu0
  %1459 = vmatprep.mubr.f32.mxu0 0.0
  %v1460 = vand.u32 %v1286, 4294901760
  %v1461 = vsub.f32 %v1286, %v1460
  %v1462 = vand.u32 %v1461, 4294901760
  %v1463 = vsub.f32 %v1461, %v1462
  %v1464 = vand.u32 %v1463, 4294901760
  %1465 = vmatmul.mubr.f32.gmra.mrb[0].mxu0 %v1464
  %v1466 = vpop.f32.mrb[0].mxu0
  %v1467 = vadd.f32 %v1264, %v1466
  %v1468 = vpop.f32.mrb[0].mxu0
  %1469 = vmatprep.mubr.f32.mxu0 0.0
  %v1470 = vand.u32 %v1289, 4294901760
  %v1471 = vsub.f32 %v1289, %v1470
  %v1472 = vand.u32 %v1471, 4294901760
  %v1473 = vsub.f32 %v1471, %v1472
  %v1474 = vand.u32 %v1473, 4294901760
  %1475 = vmatmul.mubr.f32.gmra.mrb[0].mxu0 %v1474
  %v1476 = vpop.f32.mrb[0].mxu0
  %v1477 = vadd.f32 %v1264, %v1476
  %v1478 = vpop.f32.mrb[0].mxu0
  %1479 = vmatprep.mubr.f32.mxu0 0.0
  %v1480 = vand.u32 %v1292, 4294901760
  %v1481 = vsub.f32 %v1292, %v1480
  %v1482 = vand.u32 %v1481, 4294901760
  %v1483 = vsub.f32 %v1481, %v1482
  %v1484 = vand.u32 %v1483, 4294901760
  %1485 = vmatmul.mubr.f32.gmra.mrb[0].mxu0 %v1484
  %v1486 = vpop.f32.mrb[0].mxu0
  %v1487 = vadd.f32 %v1264, %v1486
  %v1488 = vpop.f32.mrb[0].mxu0
  %1489 = vmatprep.mubr.f32.mxu0 0.0
  %v1490 = vand.u32 %v1295, 4294901760
  %v1491 = vsub.f32 %v1295, %v1490
  %v1492 = vand.u32 %v1491, 4294901760
  %v1493 = vsub.f32 %v1491, %v1492
  %v1494 = vand.u32 %v1493, 4294901760
  %1495 = vmatmul.mubr.f32.gmra.mrb[0].mxu0 %v1494
  %v1496 = vpop.f32.mrb[0].mxu0
  %v1497 = vadd.f32 %v1264, %v1496
  %v1498 = vpop.f32.mrb[0].mxu0
  %1499 = vmatprep.mubr.f32.mxu0 0.0
  %v1500 = vand.u32 %v1298, 4294901760
  %v1501 = vsub.f32 %v1298, %v1500
  %v1502 = vand.u32 %v1501, 4294901760
  %v1503 = vsub.f32 %v1501, %v1502
  %v1504 = vand.u32 %v1503, 4294901760
  %1505 = vmatmul.mubr.f32.gmra.mrb[0].mxu0 %v1504
  %v1506 = vpop.f32.mrb[0].mxu0
  %v1507 = vadd.f32 %v1264, %v1506
  %v1508 = vpop.f32.mrb[0].mxu0
  %1509 = vmatprep.mubr.f32.mxu0 0.0
  %v1510 = vand.u32 %v1301, 4294901760
  %v1511 = vsub.f32 %v1301, %v1510
  %v1512 = vand.u32 %v1511, 4294901760
  %v1513 = vsub.f32 %v1511, %v1512
  %v1514 = vand.u32 %v1513, 4294901760
  %1515 = vmatmul.mubr.f32.gmra.mrb[0].mxu0 %v1514
  %v1516 = vpop.f32.mrb[0].mxu0
  %v1517 = vadd.f32 %v1264, %v1516
  %v1518 = vpop.f32.mrb[0].mxu0
  %1519 = vmatprep.mubr.f32.mxu0 0.0
  %v1520 = vand.u32 %v1304, 4294901760
  %v1521 = vsub.f32 %v1304, %v1520
  %v1522 = vand.u32 %v1521, 4294901760
  %v1523 = vsub.f32 %v1521, %v1522
  %v1524 = vand.u32 %v1523, 4294901760
  %1525 = vmatmul.mubr.f32.gmra.mrb[0].mxu0 %v1524
  %v1526 = vpop.f32.mrb[0].mxu0
  %v1527 = vadd.f32 %v1264, %v1526
  %v1528 = vpop.f32.mrb[0].mxu0
  %1529 = vmatprep.mubr.f32.mxu0 0.0
  %v1530 = vand.u32 %v1307, 4294901760
  %v1531 = vsub.f32 %v1307, %v1530
  %v1532 = vand.u32 %v1531, 4294901760
  %v1533 = vsub.f32 %v1531, %v1532
  %v1534 = vand.u32 %v1533, 4294901760
  %1535 = vmatmul.mubr.f32.gmra.mrb[0].mxu0 %v1534
  %v1536 = vpop.f32.mrb[0].mxu0
  %v1537 = vadd.f32 %v1264, %v1536
  %v1538 = vpop.f32.mrb[0].mxu0
  %1539 = vmatprep.mubr.f32.mxu0 0.0
  %v1540 = vand.u32 %v1310, 4294901760
  %v1541 = vsub.f32 %v1310, %v1540
  %v1542 = vand.u32 %v1541, 4294901760
  %v1543 = vsub.f32 %v1541, %v1542
  %v1544 = vand.u32 %v1543, 4294901760
  %1545 = vmatmul.mubr.f32.gmra.mrb[0].mxu0 %v1544
  %v1546 = vpop.f32.mrb[0].mxu0
  %v1547 = vadd.f32 %v1264, %v1546
  %v1548 = vpop.f32.mrb[0].mxu0
  %1549 = vmatprep.mubr.f32.mxu0 0.0
  %v1550 = vand.u32 %v1313, 4294901760
  %v1551 = vsub.f32 %v1313, %v1550
  %v1552 = vand.u32 %v1551, 4294901760
  %v1553 = vsub.f32 %v1551, %v1552
  %v1554 = vand.u32 %v1553, 4294901760
  %1555 = vmatmul.mubr.f32.gmra.mrb[0].mxu0 %v1554
  %v1556 = vpop.f32.mrb[0].mxu0
  %v1557 = vadd.f32 %v1264, %v1556
  %v1558 = vpop.f32.mrb[0].mxu0
  %1559 = vdwg.mxu0
  %1560 = vmatprep.subr.mxu0 0.0
  %v1561 = vand.u32 %v1316, 4294901760
  %v1562 = vsub.f32 %v1316, %v1561
  %v1563 = vand.u32 %v1562, 4294901760
  %v1564 = vsub.f32 %v1562, %v1563
  %v1565 = vand.u32 %v1564, 4294901760
  %1566 = vmatpush1.xpose.msra.mxu0 %v1565
  %1567 = vmatprep.subr.mxu0 0.0
  %v1568 = vand.u32 %v1319, 4294901760
  %v1569 = vsub.f32 %v1319, %v1568
  %v1570 = vand.u32 %v1569, 4294901760
  %v1571 = vsub.f32 %v1569, %v1570
  %v1572 = vand.u32 %v1571, 4294901760
  %1573 = vmatpush1.xpose.msra.mxu0 %v1572
  %1574 = vmatprep.subr.mxu0 0.0
  %v1575 = vand.u32 %v1322, 4294901760
  %v1576 = vsub.f32 %v1322, %v1575
  %v1577 = vand.u32 %v1576, 4294901760
  %v1578 = vsub.f32 %v1576, %v1577
  %v1579 = vand.u32 %v1578, 4294901760
  %1580 = vmatpush1.xpose.msra.mxu0 %v1579
  %1581 = vmatprep.subr.mxu0 0.0
  %v1582 = vand.u32 %v1325, 4294901760
  %v1583 = vsub.f32 %v1325, %v1582
  %v1584 = vand.u32 %v1583, 4294901760
  %v1585 = vsub.f32 %v1583, %v1584
  %v1586 = vand.u32 %v1585, 4294901760
  %1587 = vmatpush1.xpose.msra.mxu0 %v1586
  %1588 = vmatprep.subr.mxu0 0.0
  %v1589 = vand.u32 %v1328, 4294901760
  %v1590 = vsub.f32 %v1328, %v1589
  %v1591 = vand.u32 %v1590, 4294901760
  %v1592 = vsub.f32 %v1590, %v1591
  %v1593 = vand.u32 %v1592, 4294901760
  %1594 = vmatpush1.xpose.msra.mxu0 %v1593
  %1595 = vmatprep.subr.mxu0 0.0
  %1596 = vmatpush1.xpose.msra.mxu0 0.0
  %1597 = vmatprep.subr.mxu0 0.0
  %1598 = vmatpush1.xpose.msra.mxu0 0.0
  %1599 = vmatprep.subr.mxu0 0.0
  %1600 = vmatpush1.xpose.msra.mxu0 0.0
  %1601 = vmatprep.subr.mxu0 0.0
  %1602 = vmatpush1.xpose.msra.mxu0 0.0
  %1603 = vmatprep.subr.mxu0 0.0
  %1604 = vmatpush1.xpose.msra.mxu0 0.0
  %1605 = vmatprep.subr.mxu0 0.0
  %1606 = vmatpush1.xpose.msra.mxu0 0.0
  %1607 = vmatprep.subr.mxu0 0.0
  %1608 = vmatpush1.xpose.msra.mxu0 0.0
  %1609 = vmatprep.subr.mxu0 0.0
  %1610 = vmatpush1.xpose.msra.mxu0 0.0
  %1611 = vmatprep.subr.mxu0 0.0
  %1612 = vmatpush1.xpose.msra.mxu0 0.0
  %1613 = vmatprep.subr.mxu0 0.0
  %1614 = vmatpush1.xpose.msra.mxu0 0.0
  %1615 = vmatprep.subr.mxu0 0.0
  %1616 = vmatpush1.xpose.msra.mxu0 0.0
  %1617 = vmatprep.subr.mxu0 0.0
  %1618 = vmatpush1.xpose.msra.mxu0 0.0
  %1619 = vmatprep.subr.mxu0 0.0
  %1620 = vmatpush1.xpose.msra.mxu0 0.0
  %1621 = vmatprep.subr.mxu0 0.0
  %1622 = vmatpush1.xpose.msra.mxu0 0.0
  %1623 = vmatprep.subr.mxu0 0.0
  %1624 = vmatpush1.xpose.msra.mxu0 0.0
  %1625 = vmatprep.subr.mxu0 0.0
  %1626 = vmatpush1.xpose.msra.mxu0 0.0
  %1627 = vmatprep.subr.mxu0 0.0
  %1628 = vmatpush1.xpose.msra.mxu0 0.0
  %1629 = vmatprep.subr.mxu0 0.0
  %1630 = vmatpush1.xpose.msra.mxu0 0.0
  %1631 = vmatprep.subr.mxu0 0.0
  %1632 = vmatpush1.xpose.msra.mxu0 0.0
  %1633 = vmatprep.subr.mxu0 0.0
  %1634 = vmatpush1.xpose.msra.mxu0 0.0
  %1635 = vmatprep.subr.mxu0 0.0
  %1636 = vmatpush1.xpose.msra.mxu0 0.0
  %1637 = vmatprep.subr.mxu0 0.0
  %1638 = vmatpush1.xpose.msra.mxu0 0.0
  %1639 = vmatprep.subr.mxu0 0.0
  %1640 = vmatpush1.xpose.msra.mxu0 0.0
  %1641 = vmatprep.subr.mxu0 0.0
  %1642 = vmatpush1.xpose.msra.mxu0 0.0
  %1643 = vmatprep.subr.mxu0 0.0
  %1644 = vmatpush1.xpose.msra.mxu0 0.0
  %1645 = vmatprep.subr.mxu0 0.0
  %1646 = vmatpush1.xpose.msra.mxu0 0.0
  %1647 = vmatprep.subr.mxu0 0.0
  %1648 = vmatpush1.xpose.msra.mxu0 0.0
  %1649 = vmatprep.mubr.f32.mxu0 0.0
  %v1650 = vand.u32 %v1268, 4294901760
  %1651 = vmatmul.mubr.f32.gmra.mrb[0].mxu0 %v1650
  %v1652 = vpop.f32.mrb[0].mxu0
  %v1653 = vadd.f32 %v1407, %v1652
  %v1654 = vpop.f32.mrb[0].mxu0
  %1655 = vmatprep.mubr.f32.mxu0 0.0
  %v1656 = vand.u32 %v1271, 4294901760
  %1657 = vmatmul.mubr.f32.gmra.mrb[0].mxu0 %v1656
  %v1658 = vpop.f32.mrb[0].mxu0
  %v1659 = vadd.f32 %v1417, %v1658
  %v1660 = vpop.f32.mrb[0].mxu0
  %1661 = vmatprep.mubr.f32.mxu0 0.0
  %v1662 = vand.u32 %v1274, 4294901760
  %1663 = vmatmul.mubr.f32.gmra.mrb[0].mxu0 %v1662
  %v1664 = vpop.f32.mrb[0].mxu0
  %v1665 = vadd.f32 %v1427, %v1664
  %v1666 = vpop.f32.mrb[0].mxu0
  %1667 = vmatprep.mubr.f32.mxu0 0.0
  %v1668 = vand.u32 %v1277, 4294901760
  %1669 = vmatmul.mubr.f32.gmra.mrb[0].mxu0 %v1668
  %v1670 = vpop.f32.mrb[0].mxu0
  %v1671 = vadd.f32 %v1437, %v1670
  %v1672 = vpop.f32.mrb[0].mxu0
  %1673 = vmatprep.mubr.f32.mxu0 0.0
  %v1674 = vand.u32 %v1280, 4294901760
  %1675 = vmatmul.mubr.f32.gmra.mrb[0].mxu0 %v1674
  %v1676 = vpop.f32.mrb[0].mxu0
  %v1677 = vadd.f32 %v1447, %v1676
  %v1678 = vpop.f32.mrb[0].mxu0
  %1679 = vmatprep.mubr.f32.mxu0 0.0
  %v1680 = vand.u32 %v1283, 4294901760
  %1681 = vmatmul.mubr.f32.gmra.mrb[0].mxu0 %v1680
  %v1682 = vpop.f32.mrb[0].mxu0
  %v1683 = vadd.f32 %v1457, %v1682
  %v1684 = vpop.f32.mrb[0].mxu0
  %1685 = vmatprep.mubr.f32.mxu0 0.0
  %v1686 = vand.u32 %v1286, 4294901760
  %1687 = vmatmul.mubr.f32.gmra.mrb[0].mxu0 %v1686
  %v1688 = vpop.f32.mrb[0].mxu0
  %v1689 = vadd.f32 %v1467, %v1688
  %v1690 = vpop.f32.mrb[0].mxu0
  %1691 = vmatprep.mubr.f32.mxu0 0.0
  %v1692 = vand.u32 %v1289, 4294901760
  %1693 = vmatmul.mubr.f32.gmra.mrb[0].mxu0 %v1692
  %v1694 = vpop.f32.mrb[0].mxu0
  %v1695 = vadd.f32 %v1477, %v1694
  %v1696 = vpop.f32.mrb[0].mxu0
  %1697 = vmatprep.mubr.f32.mxu0 0.0
  %v1698 = vand.u32 %v1292, 4294901760
  %1699 = vmatmul.mubr.f32.gmra.mrb[0].mxu0 %v1698
  %v1700 = vpop.f32.mrb[0].mxu0
  %v1701 = vadd.f32 %v1487, %v1700
  %v1702 = vpop.f32.mrb[0].mxu0
  %1703 = vmatprep.mubr.f32.mxu0 0.0
  %v1704 = vand.u32 %v1295, 4294901760
  %1705 = vmatmul.mubr.f32.gmra.mrb[0].mxu0 %v1704
  %v1706 = vpop.f32.mrb[0].mxu0
  %v1707 = vadd.f32 %v1497, %v1706
  %v1708 = vpop.f32.mrb[0].mxu0
  %1709 = vmatprep.mubr.f32.mxu0 0.0
  %v1710 = vand.u32 %v1298, 4294901760
  %1711 = vmatmul.mubr.f32.gmra.mrb[0].mxu0 %v1710
  %v1712 = vpop.f32.mrb[0].mxu0
  %v1713 = vadd.f32 %v1507, %v1712
  %v1714 = vpop.f32.mrb[0].mxu0
  %1715 = vmatprep.mubr.f32.mxu0 0.0
  %v1716 = vand.u32 %v1301, 4294901760
  %1717 = vmatmul.mubr.f32.gmra.mrb[0].mxu0 %v1716
  %v1718 = vpop.f32.mrb[0].mxu0
  %v1719 = vadd.f32 %v1517, %v1718
  %v1720 = vpop.f32.mrb[0].mxu0
  %1721 = vmatprep.mubr.f32.mxu0 0.0
  %v1722 = vand.u32 %v1304, 4294901760
  %1723 = vmatmul.mubr.f32.gmra.mrb[0].mxu0 %v1722
  %v1724 = vpop.f32.mrb[0].mxu0
  %v1725 = vadd.f32 %v1527, %v1724
  %v1726 = vpop.f32.mrb[0].mxu0
  %1727 = vmatprep.mubr.f32.mxu0 0.0
  %v1728 = vand.u32 %v1307, 4294901760
  %1729 = vmatmul.mubr.f32.gmra.mrb[0].mxu0 %v1728
  %v1730 = vpop.f32.mrb[0].mxu0
  %v1731 = vadd.f32 %v1537, %v1730
  %v1732 = vpop.f32.mrb[0].mxu0
  %1733 = vmatprep.mubr.f32.mxu0 0.0
  %v1734 = vand.u32 %v1310, 4294901760
  %1735 = vmatmul.mubr.f32.gmra.mrb[0].mxu0 %v1734
  %v1736 = vpop.f32.mrb[0].mxu0
  %v1737 = vadd.f32 %v1547, %v1736
  %v1738 = vpop.f32.mrb[0].mxu0
  %1739 = vmatprep.mubr.f32.mxu0 0.0
  %v1740 = vand.u32 %v1313, 4294901760
  %1741 = vmatmul.mubr.f32.gmra.mrb[0].mxu0 %v1740
  %v1742 = vpop.f32.mrb[0].mxu0
  %v1743 = vadd.f32 %v1557, %v1742
  %v1744 = vpop.f32.mrb[0].mxu0
  %1745 = vdwg.mxu0
  %1746 = vmatprep.subr.mxu0 0.0
  %v1747 = vand.u32 %v1316, 4294901760
  %v1748 = vsub.f32 %v1316, %v1747
  %1749 = vmatpush1.xpose.msra.mxu0 %v1748
  %1750 = vmatprep.subr.mxu0 0.0
  %v1751 = vand.u32 %v1319, 4294901760
  %v1752 = vsub.f32 %v1319, %v1751
  %1753 = vmatpush1.xpose.msra.mxu0 %v1752
  %1754 = vmatprep.subr.mxu0 0.0
  %v1755 = vand.u32 %v1322, 4294901760
  %v1756 = vsub.f32 %v1322, %v1755
  %1757 = vmatpush1.xpose.msra.mxu0 %v1756
  %1758 = vmatprep.subr.mxu0 0.0
  %v1759 = vand.u32 %v1325, 4294901760
  %v1760 = vsub.f32 %v1325, %v1759
  %1761 = vmatpush1.xpose.msra.mxu0 %v1760
  %1762 = vmatprep.subr.mxu0 0.0
  %v1763 = vand.u32 %v1328, 4294901760
  %v1764 = vsub.f32 %v1328, %v1763
  %1765 = vmatpush1.xpose.msra.mxu0 %v1764
  %1766 = vmatprep.subr.mxu0 0.0
  %1767 = vmatpush1.xpose.msra.mxu0 0.0
  %1768 = vmatprep.subr.mxu0 0.0
  %1769 = vmatpush1.xpose.msra.mxu0 0.0
  %1770 = vmatprep.subr.mxu0 0.0
  %1771 = vmatpush1.xpose.msra.mxu0 0.0
  %1772 = vmatprep.subr.mxu0 0.0
  %1773 = vmatpush1.xpose.msra.mxu0 0.0
  %1774 = vmatprep.subr.mxu0 0.0
  %1775 = vmatpush1.xpose.msra.mxu0 0.0
  %1776 = vmatprep.subr.mxu0 0.0
  %1777 = vmatpush1.xpose.msra.mxu0 0.0
  %1778 = vmatprep.subr.mxu0 0.0
  %1779 = vmatpush1.xpose.msra.mxu0 0.0
  %1780 = vmatprep.subr.mxu0 0.0
  %1781 = vmatpush1.xpose.msra.mxu0 0.0
  %1782 = vmatprep.subr.mxu0 0.0
  %1783 = vmatpush1.xpose.msra.mxu0 0.0
  %1784 = vmatprep.subr.mxu0 0.0
  %1785 = vmatpush1.xpose.msra.mxu0 0.0
  %1786 = vmatprep.subr.mxu0 0.0
  %1787 = vmatpush1.xpose.msra.mxu0 0.0
  %1788 = vmatprep.subr.mxu0 0.0
  %1789 = vmatpush1.xpose.msra.mxu0 0.0
  %1790 = vmatprep.subr.mxu0 0.0
  %1791 = vmatpush1.xpose.msra.mxu0 0.0
  %1792 = vmatprep.subr.mxu0 0.0
  %1793 = vmatpush1.xpose.msra.mxu0 0.0
  %1794 = vmatprep.subr.mxu0 0.0
  %1795 = vmatpush1.xpose.msra.mxu0 0.0
  %1796 = vmatprep.subr.mxu0 0.0
  %1797 = vmatpush1.xpose.msra.mxu0 0.0
  %1798 = vmatprep.subr.mxu0 0.0
  %1799 = vmatpush1.xpose.msra.mxu0 0.0
  %1800 = vmatprep.subr.mxu0 0.0
  %1801 = vmatpush1.xpose.msra.mxu0 0.0
  %1802 = vmatprep.subr.mxu0 0.0
  %1803 = vmatpush1.xpose.msra.mxu0 0.0
  %1804 = vmatprep.subr.mxu0 0.0
  %1805 = vmatpush1.xpose.msra.mxu0 0.0
  %1806 = vmatprep.subr.mxu0 0.0
  %1807 = vmatpush1.xpose.msra.mxu0 0.0
  %1808 = vmatprep.subr.mxu0 0.0
  %1809 = vmatpush1.xpose.msra.mxu0 0.0
  %1810 = vmatprep.subr.mxu0 0.0
  %1811 = vmatpush1.xpose.msra.mxu0 0.0
  %1812 = vmatprep.subr.mxu0 0.0
  %1813 = vmatpush1.xpose.msra.mxu0 0.0
  %1814 = vmatprep.subr.mxu0 0.0
  %1815 = vmatpush1.xpose.msra.mxu0 0.0
  %1816 = vmatprep.subr.mxu0 0.0
  %1817 = vmatpush1.xpose.msra.mxu0 0.0
  %1818 = vmatprep.subr.mxu0 0.0
  %1819 = vmatpush1.xpose.msra.mxu0 0.0
  %1820 = vmatprep.mubr.f32.mxu0 0.0
  %v1821 = vand.u32 %v1268, 4294901760
  %v1822 = vsub.f32 %v1268, %v1821
  %1823 = vmatmul.mubr.f32.gmra.mrb[0].mxu0 %v1822
  %v1824 = vpop.f32.mrb[0].mxu0
  %v1825 = vadd.f32 %v1653, %v1824
  %v1826 = vpop.f32.mrb[0].mxu0
  %1827 = vmatprep.mubr.f32.mxu0 0.0
  %v1828 = vand.u32 %v1271, 4294901760
  %v1829 = vsub.f32 %v1271, %v1828
  %1830 = vmatmul.mubr.f32.gmra.mrb[0].mxu0 %v1829
  %v1831 = vpop.f32.mrb[0].mxu0
  %v1832 = vadd.f32 %v1659, %v1831
  %v1833 = vpop.f32.mrb[0].mxu0
  %1834 = vmatprep.mubr.f32.mxu0 0.0
  %v1835 = vand.u32 %v1274, 4294901760
  %v1836 = vsub.f32 %v1274, %v1835
  %1837 = vmatmul.mubr.f32.gmra.mrb[0].mxu0 %v1836
  %v1838 = vpop.f32.mrb[0].mxu0
  %v1839 = vadd.f32 %v1665, %v1838
  %v1840 = vpop.f32.mrb[0].mxu0
  %1841 = vmatprep.mubr.f32.mxu0 0.0
  %v1842 = vand.u32 %v1277, 4294901760
  %v1843 = vsub.f32 %v1277, %v1842
  %1844 = vmatmul.mubr.f32.gmra.mrb[0].mxu0 %v1843
  %v1845 = vpop.f32.mrb[0].mxu0
  %v1846 = vadd.f32 %v1671, %v1845
  %v1847 = vpop.f32.mrb[0].mxu0
  %1848 = vmatprep.mubr.f32.mxu0 0.0
  %v1849 = vand.u32 %v1280, 4294901760
  %v1850 = vsub.f32 %v1280, %v1849
  %1851 = vmatmul.mubr.f32.gmra.mrb[0].mxu0 %v1850
  %v1852 = vpop.f32.mrb[0].mxu0
  %v1853 = vadd.f32 %v1677, %v1852
  %v1854 = vpop.f32.mrb[0].mxu0
  %1855 = vmatprep.mubr.f32.mxu0 0.0
  %v1856 = vand.u32 %v1283, 4294901760
  %v1857 = vsub.f32 %v1283, %v1856
  %1858 = vmatmul.mubr.f32.gmra.mrb[0].mxu0 %v1857
  %v1859 = vpop.f32.mrb[0].mxu0
  %v1860 = vadd.f32 %v1683, %v1859
  %v1861 = vpop.f32.mrb[0].mxu0
  %1862 = vmatprep.mubr.f32.mxu0 0.0
  %v1863 = vand.u32 %v1286, 4294901760
  %v1864 = vsub.f32 %v1286, %v1863
  %1865 = vmatmul.mubr.f32.gmra.mrb[0].mxu0 %v1864
  %v1866 = vpop.f32.mrb[0].mxu0
  %v1867 = vadd.f32 %v1689, %v1866
  %v1868 = vpop.f32.mrb[0].mxu0
  %1869 = vmatprep.mubr.f32.mxu0 0.0
  %v1870 = vand.u32 %v1289, 4294901760
  %v1871 = vsub.f32 %v1289, %v1870
  %1872 = vmatmul.mubr.f32.gmra.mrb[0].mxu0 %v1871
  %v1873 = vpop.f32.mrb[0].mxu0
  %v1874 = vadd.f32 %v1695, %v1873
  %v1875 = vpop.f32.mrb[0].mxu0
  %1876 = vmatprep.mubr.f32.mxu0 0.0
  %v1877 = vand.u32 %v1292, 4294901760
  %v1878 = vsub.f32 %v1292, %v1877
  %1879 = vmatmul.mubr.f32.gmra.mrb[0].mxu0 %v1878
  %v1880 = vpop.f32.mrb[0].mxu0
  %v1881 = vadd.f32 %v1701, %v1880
  %v1882 = vpop.f32.mrb[0].mxu0
  %1883 = vmatprep.mubr.f32.mxu0 0.0
  %v1884 = vand.u32 %v1295, 4294901760
  %v1885 = vsub.f32 %v1295, %v1884
  %1886 = vmatmul.mubr.f32.gmra.mrb[0].mxu0 %v1885
  %v1887 = vpop.f32.mrb[0].mxu0
  %v1888 = vadd.f32 %v1707, %v1887
  %v1889 = vpop.f32.mrb[0].mxu0
  %1890 = vmatprep.mubr.f32.mxu0 0.0
  %v1891 = vand.u32 %v1298, 4294901760
  %v1892 = vsub.f32 %v1298, %v1891
  %1893 = vmatmul.mubr.f32.gmra.mrb[0].mxu0 %v1892
  %v1894 = vpop.f32.mrb[0].mxu0
  %v1895 = vadd.f32 %v1713, %v1894
  %v1896 = vpop.f32.mrb[0].mxu0
  %1897 = vmatprep.mubr.f32.mxu0 0.0
  %v1898 = vand.u32 %v1301, 4294901760
  %v1899 = vsub.f32 %v1301, %v1898
  %1900 = vmatmul.mubr.f32.gmra.mrb[0].mxu0 %v1899
  %v1901 = vpop.f32.mrb[0].mxu0
  %v1902 = vadd.f32 %v1719, %v1901
  %v1903 = vpop.f32.mrb[0].mxu0
  %1904 = vmatprep.mubr.f32.mxu0 0.0
  %v1905 = vand.u32 %v1304, 4294901760
  %v1906 = vsub.f32 %v1304, %v1905
  %1907 = vmatmul.mubr.f32.gmra.mrb[0].mxu0 %v1906
  %v1908 = vpop.f32.mrb[0].mxu0
  %v1909 = vadd.f32 %v1725, %v1908
  %v1910 = vpop.f32.mrb[0].mxu0
  %1911 = vmatprep.mubr.f32.mxu0 0.0
  %v1912 = vand.u32 %v1307, 4294901760
  %v1913 = vsub.f32 %v1307, %v1912
  %1914 = vmatmul.mubr.f32.gmra.mrb[0].mxu0 %v1913
  %v1915 = vpop.f32.mrb[0].mxu0
  %v1916 = vadd.f32 %v1731, %v1915
  %v1917 = vpop.f32.mrb[0].mxu0
  %1918 = vmatprep.mubr.f32.mxu0 0.0
  %v1919 = vand.u32 %v1310, 4294901760
  %v1920 = vsub.f32 %v1310, %v1919
  %1921 = vmatmul.mubr.f32.gmra.mrb[0].mxu0 %v1920
  %v1922 = vpop.f32.mrb[0].mxu0
  %v1923 = vadd.f32 %v1737, %v1922
  %v1924 = vpop.f32.mrb[0].mxu0
  %1925 = vmatprep.mubr.f32.mxu0 0.0
  %v1926 = vand.u32 %v1313, 4294901760
  %v1927 = vsub.f32 %v1313, %v1926
  %1928 = vmatmul.mubr.f32.gmra.mrb[0].mxu0 %v1927
  %v1929 = vpop.f32.mrb[0].mxu0
  %v1930 = vadd.f32 %v1743, %v1929
  %v1931 = vpop.f32.mrb[0].mxu0
  %1932 = vdwg.mxu0
  %1933 = vmatprep.subr.mxu0 0.0
  %v1934 = vand.u32 %v1316, 4294901760
  %1935 = vmatpush1.xpose.msra.mxu0 %v1934
  %1936 = vmatprep.subr.mxu0 0.0
  %v1937 = vand.u32 %v1319, 4294901760
  %1938 = vmatpush1.xpose.msra.mxu0 %v1937
  %1939 = vmatprep.subr.mxu0 0.0
  %v1940 = vand.u32 %v1322, 4294901760
  %1941 = vmatpush1.xpose.msra.mxu0 %v1940
  %1942 = vmatprep.subr.mxu0 0.0
  %v1943 = vand.u32 %v1325, 4294901760
  %1944 = vmatpush1.xpose.msra.mxu0 %v1943
  %1945 = vmatprep.subr.mxu0 0.0
  %v1946 = vand.u32 %v1328, 4294901760
  %1947 = vmatpush1.xpose.msra.mxu0 %v1946
  %1948 = vmatprep.subr.mxu0 0.0
  %1949 = vmatpush1.xpose.msra.mxu0 0.0
  %1950 = vmatprep.subr.mxu0 0.0
  %1951 = vmatpush1.xpose.msra.mxu0 0.0
  %1952 = vmatprep.subr.mxu0 0.0
  %1953 = vmatpush1.xpose.msra.mxu0 0.0
  %1954 = vmatprep.subr.mxu0 0.0
  %1955 = vmatpush1.xpose.msra.mxu0 0.0
  %1956 = vmatprep.subr.mxu0 0.0
  %1957 = vmatpush1.xpose.msra.mxu0 0.0
  %1958 = vmatprep.subr.mxu0 0.0
  %1959 = vmatpush1.xpose.msra.mxu0 0.0
  %1960 = vmatprep.subr.mxu0 0.0
  %1961 = vmatpush1.xpose.msra.mxu0 0.0
  %1962 = vmatprep.subr.mxu0 0.0
  %1963 = vmatpush1.xpose.msra.mxu0 0.0
  %1964 = vmatprep.subr.mxu0 0.0
  %1965 = vmatpush1.xpose.msra.mxu0 0.0
  %1966 = vmatprep.subr.mxu0 0.0
  %1967 = vmatpush1.xpose.msra.mxu0 0.0
  %1968 = vmatprep.subr.mxu0 0.0
  %1969 = vmatpush1.xpose.msra.mxu0 0.0
  %1970 = vmatprep.subr.mxu0 0.0
  %1971 = vmatpush1.xpose.msra.mxu0 0.0
  %1972 = vmatprep.subr.mxu0 0.0
  %1973 = vmatpush1.xpose.msra.mxu0 0.0
  %1974 = vmatprep.subr.mxu0 0.0
  %1975 = vmatpush1.xpose.msra.mxu0 0.0
  %1976 = vmatprep.subr.mxu0 0.0
  %1977 = vmatpush1.xpose.msra.mxu0 0.0
  %1978 = vmatprep.subr.mxu0 0.0
  %1979 = vmatpush1.xpose.msra.mxu0 0.0
  %1980 = vmatprep.subr.mxu0 0.0
  %1981 = vmatpush1.xpose.msra.mxu0 0.0
  %1982 = vmatprep.subr.mxu0 0.0
  %1983 = vmatpush1.xpose.msra.mxu0 0.0
  %1984 = vmatprep.subr.mxu0 0.0
  %1985 = vmatpush1.xpose.msra.mxu0 0.0
  %1986 = vmatprep.subr.mxu0 0.0
  %1987 = vmatpush1.xpose.msra.mxu0 0.0
  %1988 = vmatprep.subr.mxu0 0.0
  %1989 = vmatpush1.xpose.msra.mxu0 0.0
  %1990 = vmatprep.subr.mxu0 0.0
  %1991 = vmatpush1.xpose.msra.mxu0 0.0
  %1992 = vmatprep.subr.mxu0 0.0
  %1993 = vmatpush1.xpose.msra.mxu0 0.0
  %1994 = vmatprep.subr.mxu0 0.0
  %1995 = vmatpush1.xpose.msra.mxu0 0.0
  %1996 = vmatprep.subr.mxu0 0.0
  %1997 = vmatpush1.xpose.msra.mxu0 0.0
  %1998 = vmatprep.subr.mxu0 0.0
  %1999 = vmatpush1.xpose.msra.mxu0 0.0
  %2000 = vmatprep.subr.mxu0 0.0
  %2001 = vmatpush1.xpose.msra.mxu0 0.0
  %2002 = vmatprep.mubr.f32.mxu0 0.0
  %v2003 = vand.u32 %v1268, 4294901760
  %v2004 = vsub.f32 %v1268, %v2003
  %v2005 = vand.u32 %v2004, 4294901760
  %2006 = vmatmul.mubr.f32.gmra.mrb[0].mxu0 %v2005
  %v2007 = vpop.f32.mrb[0].mxu0
  %v2008 = vadd.f32 %v1825, %v2007
  %v2009 = vpop.f32.mrb[0].mxu0
  %2010 = vmatprep.mubr.f32.mxu0 0.0
  %v2011 = vand.u32 %v1271, 4294901760
  %v2012 = vsub.f32 %v1271, %v2011
  %v2013 = vand.u32 %v2012, 4294901760
  %2014 = vmatmul.mubr.f32.gmra.mrb[0].mxu0 %v2013
  %v2015 = vpop.f32.mrb[0].mxu0
  %v2016 = vadd.f32 %v1832, %v2015
  %v2017 = vpop.f32.mrb[0].mxu0
  %2018 = vmatprep.mubr.f32.mxu0 0.0
  %v2019 = vand.u32 %v1274, 4294901760
  %v2020 = vsub.f32 %v1274, %v2019
  %v2021 = vand.u32 %v2020, 4294901760
  %2022 = vmatmul.mubr.f32.gmra.mrb[0].mxu0 %v2021
  %v2023 = vpop.f32.mrb[0].mxu0
  %v2024 = vadd.f32 %v1839, %v2023
  %v2025 = vpop.f32.mrb[0].mxu0
  %2026 = vmatprep.mubr.f32.mxu0 0.0
  %v2027 = vand.u32 %v1277, 4294901760
  %v2028 = vsub.f32 %v1277, %v2027
  %v2029 = vand.u32 %v2028, 4294901760
  %2030 = vmatmul.mubr.f32.gmra.mrb[0].mxu0 %v2029
  %v2031 = vpop.f32.mrb[0].mxu0
  %v2032 = vadd.f32 %v1846, %v2031
  %v2033 = vpop.f32.mrb[0].mxu0
  %2034 = vmatprep.mubr.f32.mxu0 0.0
  %v2035 = vand.u32 %v1280, 4294901760
  %v2036 = vsub.f32 %v1280, %v2035
  %v2037 = vand.u32 %v2036, 4294901760
  %2038 = vmatmul.mubr.f32.gmra.mrb[0].mxu0 %v2037
  %v2039 = vpop.f32.mrb[0].mxu0
  %v2040 = vadd.f32 %v1853, %v2039
  %v2041 = vpop.f32.mrb[0].mxu0
  %2042 = vmatprep.mubr.f32.mxu0 0.0
  %v2043 = vand.u32 %v1283, 4294901760
  %v2044 = vsub.f32 %v1283, %v2043
  %v2045 = vand.u32 %v2044, 4294901760
  %2046 = vmatmul.mubr.f32.gmra.mrb[0].mxu0 %v2045
  %v2047 = vpop.f32.mrb[0].mxu0
  %v2048 = vadd.f32 %v1860, %v2047
  %v2049 = vpop.f32.mrb[0].mxu0
  %2050 = vmatprep.mubr.f32.mxu0 0.0
  %v2051 = vand.u32 %v1286, 4294901760
  %v2052 = vsub.f32 %v1286, %v2051
  %v2053 = vand.u32 %v2052, 4294901760
  %2054 = vmatmul.mubr.f32.gmra.mrb[0].mxu0 %v2053
  %v2055 = vpop.f32.mrb[0].mxu0
  %v2056 = vadd.f32 %v1867, %v2055
  %v2057 = vpop.f32.mrb[0].mxu0
  %2058 = vmatprep.mubr.f32.mxu0 0.0
  %v2059 = vand.u32 %v1289, 4294901760
  %v2060 = vsub.f32 %v1289, %v2059
  %v2061 = vand.u32 %v2060, 4294901760
  %2062 = vmatmul.mubr.f32.gmra.mrb[0].mxu0 %v2061
  %v2063 = vpop.f32.mrb[0].mxu0
  %v2064 = vadd.f32 %v1874, %v2063
  %v2065 = vpop.f32.mrb[0].mxu0
  %2066 = vmatprep.mubr.f32.mxu0 0.0
  %v2067 = vand.u32 %v1292, 4294901760
  %v2068 = vsub.f32 %v1292, %v2067
  %v2069 = vand.u32 %v2068, 4294901760
  %2070 = vmatmul.mubr.f32.gmra.mrb[0].mxu0 %v2069
  %v2071 = vpop.f32.mrb[0].mxu0
  %v2072 = vadd.f32 %v1881, %v2071
  %v2073 = vpop.f32.mrb[0].mxu0
  %2074 = vmatprep.mubr.f32.mxu0 0.0
  %v2075 = vand.u32 %v1295, 4294901760
  %v2076 = vsub.f32 %v1295, %v2075
  %v2077 = vand.u32 %v2076, 4294901760
  %2078 = vmatmul.mubr.f32.gmra.mrb[0].mxu0 %v2077
  %v2079 = vpop.f32.mrb[0].mxu0
  %v2080 = vadd.f32 %v1888, %v2079
  %v2081 = vpop.f32.mrb[0].mxu0
  %2082 = vmatprep.mubr.f32.mxu0 0.0
  %v2083 = vand.u32 %v1298, 4294901760
  %v2084 = vsub.f32 %v1298, %v2083
  %v2085 = vand.u32 %v2084, 4294901760
  %2086 = vmatmul.mubr.f32.gmra.mrb[0].mxu0 %v2085
  %v2087 = vpop.f32.mrb[0].mxu0
  %v2088 = vadd.f32 %v1895, %v2087
  %v2089 = vpop.f32.mrb[0].mxu0
  %2090 = vmatprep.mubr.f32.mxu0 0.0
  %v2091 = vand.u32 %v1301, 4294901760
  %v2092 = vsub.f32 %v1301, %v2091
  %v2093 = vand.u32 %v2092, 4294901760
  %2094 = vmatmul.mubr.f32.gmra.mrb[0].mxu0 %v2093
  %v2095 = vpop.f32.mrb[0].mxu0
  %v2096 = vadd.f32 %v1902, %v2095
  %v2097 = vpop.f32.mrb[0].mxu0
  %2098 = vmatprep.mubr.f32.mxu0 0.0
  %v2099 = vand.u32 %v1304, 4294901760
  %v2100 = vsub.f32 %v1304, %v2099
  %v2101 = vand.u32 %v2100, 4294901760
  %2102 = vmatmul.mubr.f32.gmra.mrb[0].mxu0 %v2101
  %v2103 = vpop.f32.mrb[0].mxu0
  %v2104 = vadd.f32 %v1909, %v2103
  %v2105 = vpop.f32.mrb[0].mxu0
  %2106 = vmatprep.mubr.f32.mxu0 0.0
  %v2107 = vand.u32 %v1307, 4294901760
  %v2108 = vsub.f32 %v1307, %v2107
  %v2109 = vand.u32 %v2108, 4294901760
  %2110 = vmatmul.mubr.f32.gmra.mrb[0].mxu0 %v2109
  %v2111 = vpop.f32.mrb[0].mxu0
  %v2112 = vadd.f32 %v1916, %v2111
  %v2113 = vpop.f32.mrb[0].mxu0
  %2114 = vmatprep.mubr.f32.mxu0 0.0
  %v2115 = vand.u32 %v1310, 4294901760
  %v2116 = vsub.f32 %v1310, %v2115
  %v2117 = vand.u32 %v2116, 4294901760
  %2118 = vmatmul.mubr.f32.gmra.mrb[0].mxu0 %v2117
  %v2119 = vpop.f32.mrb[0].mxu0
  %v2120 = vadd.f32 %v1923, %v2119
  %v2121 = vpop.f32.mrb[0].mxu0
  %2122 = vmatprep.mubr.f32.mxu0 0.0
  %v2123 = vand.u32 %v1313, 4294901760
  %v2124 = vsub.f32 %v1313, %v2123
  %v2125 = vand.u32 %v2124, 4294901760
  %2126 = vmatmul.mubr.f32.gmra.mrb[0].mxu0 %v2125
  %v2127 = vpop.f32.mrb[0].mxu0
  %v2128 = vadd.f32 %v1930, %v2127
  %v2129 = vpop.f32.mrb[0].mxu0
  %2130 = vdwg.mxu0
  %2131 = vmatprep.subr.mxu0 0.0
  %v2132 = vand.u32 %v1316, 4294901760
  %v2133 = vsub.f32 %v1316, %v2132
  %v2134 = vand.u32 %v2133, 4294901760
  %2135 = vmatpush1.xpose.msra.mxu0 %v2134
  %2136 = vmatprep.subr.mxu0 0.0
  %v2137 = vand.u32 %v1319, 4294901760
  %v2138 = vsub.f32 %v1319, %v2137
  %v2139 = vand.u32 %v2138, 4294901760
  %2140 = vmatpush1.xpose.msra.mxu0 %v2139
  %2141 = vmatprep.subr.mxu0 0.0
  %v2142 = vand.u32 %v1322, 4294901760
  %v2143 = vsub.f32 %v1322, %v2142
  %v2144 = vand.u32 %v2143, 4294901760
  %2145 = vmatpush1.xpose.msra.mxu0 %v2144
  %2146 = vmatprep.subr.mxu0 0.0
  %v2147 = vand.u32 %v1325, 4294901760
  %v2148 = vsub.f32 %v1325, %v2147
  %v2149 = vand.u32 %v2148, 4294901760
  %2150 = vmatpush1.xpose.msra.mxu0 %v2149
  %2151 = vmatprep.subr.mxu0 0.0
  %v2152 = vand.u32 %v1328, 4294901760
  %v2153 = vsub.f32 %v1328, %v2152
  %v2154 = vand.u32 %v2153, 4294901760
  %2155 = vmatpush1.xpose.msra.mxu0 %v2154
  %2156 = vmatprep.subr.mxu0 0.0
  %2157 = vmatpush1.xpose.msra.mxu0 0.0
  %2158 = vmatprep.subr.mxu0 0.0
  %2159 = vmatpush1.xpose.msra.mxu0 0.0
  %2160 = vmatprep.subr.mxu0 0.0
  %2161 = vmatpush1.xpose.msra.mxu0 0.0
  %2162 = vmatprep.subr.mxu0 0.0
  %2163 = vmatpush1.xpose.msra.mxu0 0.0
  %2164 = vmatprep.subr.mxu0 0.0
  %2165 = vmatpush1.xpose.msra.mxu0 0.0
  %2166 = vmatprep.subr.mxu0 0.0
  %2167 = vmatpush1.xpose.msra.mxu0 0.0
  %2168 = vmatprep.subr.mxu0 0.0
  %2169 = vmatpush1.xpose.msra.mxu0 0.0
  %2170 = vmatprep.subr.mxu0 0.0
  %2171 = vmatpush1.xpose.msra.mxu0 0.0
  %2172 = vmatprep.subr.mxu0 0.0
  %2173 = vmatpush1.xpose.msra.mxu0 0.0
  %2174 = vmatprep.subr.mxu0 0.0
  %2175 = vmatpush1.xpose.msra.mxu0 0.0
  %2176 = vmatprep.subr.mxu0 0.0
  %2177 = vmatpush1.xpose.msra.mxu0 0.0
  %2178 = vmatprep.subr.mxu0 0.0
  %2179 = vmatpush1.xpose.msra.mxu0 0.0
  %2180 = vmatprep.subr.mxu0 0.0
  %2181 = vmatpush1.xpose.msra.mxu0 0.0
  %2182 = vmatprep.subr.mxu0 0.0
  %2183 = vmatpush1.xpose.msra.mxu0 0.0
  %2184 = vmatprep.subr.mxu0 0.0
  %2185 = vmatpush1.xpose.msra.mxu0 0.0
  %2186 = vmatprep.subr.mxu0 0.0
  %2187 = vmatpush1.xpose.msra.mxu0 0.0
  %2188 = vmatprep.subr.mxu0 0.0
  %2189 = vmatpush1.xpose.msra.mxu0 0.0
  %2190 = vmatprep.subr.mxu0 0.0
  %2191 = vmatpush1.xpose.msra.mxu0 0.0
  %2192 = vmatprep.subr.mxu0 0.0
  %2193 = vmatpush1.xpose.msra.mxu0 0.0
  %2194 = vmatprep.subr.mxu0 0.0
  %2195 = vmatpush1.xpose.msra.mxu0 0.0
  %2196 = vmatprep.subr.mxu0 0.0
  %2197 = vmatpush1.xpose.msra.mxu0 0.0
  %2198 = vmatprep.subr.mxu0 0.0
  %2199 = vmatpush1.xpose.msra.mxu0 0.0
  %2200 = vmatprep.subr.mxu0 0.0
  %2201 = vmatpush1.xpose.msra.mxu0 0.0
  %2202 = vmatprep.subr.mxu0 0.0
  %2203 = vmatpush1.xpose.msra.mxu0 0.0
  %2204 = vmatprep.subr.mxu0 0.0
  %2205 = vmatpush1.xpose.msra.mxu0 0.0
  %2206 = vmatprep.subr.mxu0 0.0
  %2207 = vmatpush1.xpose.msra.mxu0 0.0
  %2208 = vmatprep.subr.mxu0 0.0
  %2209 = vmatpush1.xpose.msra.mxu0 0.0
  %2210 = vmatprep.mubr.f32.mxu0 0.0
  %v2211 = vand.u32 %v1268, 4294901760
  %2212 = vmatmul.mubr.f32.gmra.mrb[0].mxu0 %v2211
  %v2213 = vpop.f32.mrb[0].mxu0
  %v2214 = vadd.f32 %v2008, %v2213
  %v2215 = vpop.f32.mrb[0].mxu0
  %2216 = vmatprep.mubr.f32.mxu0 0.0
  %v2217 = vand.u32 %v1271, 4294901760
  %2218 = vmatmul.mubr.f32.gmra.mrb[0].mxu0 %v2217
  %v2219 = vpop.f32.mrb[0].mxu0
  %v2220 = vadd.f32 %v2016, %v2219
  %v2221 = vpop.f32.mrb[0].mxu0
  %2222 = vmatprep.mubr.f32.mxu0 0.0
  %v2223 = vand.u32 %v1274, 4294901760
  %2224 = vmatmul.mubr.f32.gmra.mrb[0].mxu0 %v2223
  %v2225 = vpop.f32.mrb[0].mxu0
  %v2226 = vadd.f32 %v2024, %v2225
  %v2227 = vpop.f32.mrb[0].mxu0
  %2228 = vmatprep.mubr.f32.mxu0 0.0
  %v2229 = vand.u32 %v1277, 4294901760
  %2230 = vmatmul.mubr.f32.gmra.mrb[0].mxu0 %v2229
  %v2231 = vpop.f32.mrb[0].mxu0
  %v2232 = vadd.f32 %v2032, %v2231
  %v2233 = vpop.f32.mrb[0].mxu0
  %2234 = vmatprep.mubr.f32.mxu0 0.0
  %v2235 = vand.u32 %v1280, 4294901760
  %2236 = vmatmul.mubr.f32.gmra.mrb[0].mxu0 %v2235
  %v2237 = vpop.f32.mrb[0].mxu0
  %v2238 = vadd.f32 %v2040, %v2237
  %v2239 = vpop.f32.mrb[0].mxu0
  %2240 = vmatprep.mubr.f32.mxu0 0.0
  %v2241 = vand.u32 %v1283, 4294901760
  %2242 = vmatmul.mubr.f32.gmra.mrb[0].mxu0 %v2241
  %v2243 = vpop.f32.mrb[0].mxu0
  %v2244 = vadd.f32 %v2048, %v2243
  %v2245 = vpop.f32.mrb[0].mxu0
  %2246 = vmatprep.mubr.f32.mxu0 0.0
  %v2247 = vand.u32 %v1286, 4294901760
  %2248 = vmatmul.mubr.f32.gmra.mrb[0].mxu0 %v2247
  %v2249 = vpop.f32.mrb[0].mxu0
  %v2250 = vadd.f32 %v2056, %v2249
  %v2251 = vpop.f32.mrb[0].mxu0
  %2252 = vmatprep.mubr.f32.mxu0 0.0
  %v2253 = vand.u32 %v1289, 4294901760
  %2254 = vmatmul.mubr.f32.gmra.mrb[0].mxu0 %v2253
  %v2255 = vpop.f32.mrb[0].mxu0
  %v2256 = vadd.f32 %v2064, %v2255
  %v2257 = vpop.f32.mrb[0].mxu0
  %2258 = vmatprep.mubr.f32.mxu0 0.0
  %v2259 = vand.u32 %v1292, 4294901760
  %2260 = vmatmul.mubr.f32.gmra.mrb[0].mxu0 %v2259
  %v2261 = vpop.f32.mrb[0].mxu0
  %v2262 = vadd.f32 %v2072, %v2261
  %v2263 = vpop.f32.mrb[0].mxu0
  %2264 = vmatprep.mubr.f32.mxu0 0.0
  %v2265 = vand.u32 %v1295, 4294901760
  %2266 = vmatmul.mubr.f32.gmra.mrb[0].mxu0 %v2265
  %v2267 = vpop.f32.mrb[0].mxu0
  %v2268 = vadd.f32 %v2080, %v2267
  %v2269 = vpop.f32.mrb[0].mxu0
  %2270 = vmatprep.mubr.f32.mxu0 0.0
  %v2271 = vand.u32 %v1298, 4294901760
  %2272 = vmatmul.mubr.f32.gmra.mrb[0].mxu0 %v2271
  %v2273 = vpop.f32.mrb[0].mxu0
  %v2274 = vadd.f32 %v2088, %v2273
  %v2275 = vpop.f32.mrb[0].mxu0
  %2276 = vmatprep.mubr.f32.mxu0 0.0
  %v2277 = vand.u32 %v1301, 4294901760
  %2278 = vmatmul.mubr.f32.gmra.mrb[0].mxu0 %v2277
  %v2279 = vpop.f32.mrb[0].mxu0
  %v2280 = vadd.f32 %v2096, %v2279
  %v2281 = vpop.f32.mrb[0].mxu0
  %2282 = vmatprep.mubr.f32.mxu0 0.0
  %v2283 = vand.u32 %v1304, 4294901760
  %2284 = vmatmul.mubr.f32.gmra.mrb[0].mxu0 %v2283
  %v2285 = vpop.f32.mrb[0].mxu0
  %v2286 = vadd.f32 %v2104, %v2285
  %v2287 = vpop.f32.mrb[0].mxu0
  %2288 = vmatprep.mubr.f32.mxu0 0.0
  %v2289 = vand.u32 %v1307, 4294901760
  %2290 = vmatmul.mubr.f32.gmra.mrb[0].mxu0 %v2289
  %v2291 = vpop.f32.mrb[0].mxu0
  %v2292 = vadd.f32 %v2112, %v2291
  %v2293 = vpop.f32.mrb[0].mxu0
  %2294 = vmatprep.mubr.f32.mxu0 0.0
  %v2295 = vand.u32 %v1310, 4294901760
  %2296 = vmatmul.mubr.f32.gmra.mrb[0].mxu0 %v2295
  %v2297 = vpop.f32.mrb[0].mxu0
  %v2298 = vadd.f32 %v2120, %v2297
  %v2299 = vpop.f32.mrb[0].mxu0
  %2300 = vmatprep.mubr.f32.mxu0 0.0
  %v2301 = vand.u32 %v1313, 4294901760
  %2302 = vmatmul.mubr.f32.gmra.mrb[0].mxu0 %v2301
  %v2303 = vpop.f32.mrb[0].mxu0
  %v2304 = vadd.f32 %v2128, %v2303
  %v2305 = vpop.f32.mrb[0].mxu0
  %2306 = vdwg.mxu0
  %2307 = vmatprep.subr.mxu0 0.0
  %v2308 = vand.u32 %v1316, 4294901760
  %2309 = vmatpush1.xpose.msra.mxu0 %v2308
  %2310 = vmatprep.subr.mxu0 0.0
  %v2311 = vand.u32 %v1319, 4294901760
  %2312 = vmatpush1.xpose.msra.mxu0 %v2311
  %2313 = vmatprep.subr.mxu0 0.0
  %v2314 = vand.u32 %v1322, 4294901760
  %2315 = vmatpush1.xpose.msra.mxu0 %v2314
  %2316 = vmatprep.subr.mxu0 0.0
  %v2317 = vand.u32 %v1325, 4294901760
  %2318 = vmatpush1.xpose.msra.mxu0 %v2317
  %2319 = vmatprep.subr.mxu0 0.0
  %v2320 = vand.u32 %v1328, 4294901760
  %2321 = vmatpush1.xpose.msra.mxu0 %v2320
  %2322 = vmatprep.subr.mxu0 0.0
  %2323 = vmatpush1.xpose.msra.mxu0 0.0
  %2324 = vmatprep.subr.mxu0 0.0
  %2325 = vmatpush1.xpose.msra.mxu0 0.0
  %2326 = vmatprep.subr.mxu0 0.0
  %2327 = vmatpush1.xpose.msra.mxu0 0.0
  %2328 = vmatprep.subr.mxu0 0.0
  %2329 = vmatpush1.xpose.msra.mxu0 0.0
  %2330 = vmatprep.subr.mxu0 0.0
  %2331 = vmatpush1.xpose.msra.mxu0 0.0
  %2332 = vmatprep.subr.mxu0 0.0
  %2333 = vmatpush1.xpose.msra.mxu0 0.0
  %2334 = vmatprep.subr.mxu0 0.0
  %2335 = vmatpush1.xpose.msra.mxu0 0.0
  %2336 = vmatprep.subr.mxu0 0.0
  %2337 = vmatpush1.xpose.msra.mxu0 0.0
  %2338 = vmatprep.subr.mxu0 0.0
  %2339 = vmatpush1.xpose.msra.mxu0 0.0
  %2340 = vmatprep.subr.mxu0 0.0
  %2341 = vmatpush1.xpose.msra.mxu0 0.0
  %2342 = vmatprep.subr.mxu0 0.0
  %2343 = vmatpush1.xpose.msra.mxu0 0.0
  %2344 = vmatprep.subr.mxu0 0.0
  %2345 = vmatpush1.xpose.msra.mxu0 0.0
  %2346 = vmatprep.subr.mxu0 0.0
  %2347 = vmatpush1.xpose.msra.mxu0 0.0
  %2348 = vmatprep.subr.mxu0 0.0
  %2349 = vmatpush1.xpose.msra.mxu0 0.0
  %2350 = vmatprep.subr.mxu0 0.0
  %2351 = vmatpush1.xpose.msra.mxu0 0.0
  %2352 = vmatprep.subr.mxu0 0.0
  %2353 = vmatpush1.xpose.msra.mxu0 0.0
  %2354 = vmatprep.subr.mxu0 0.0
  %2355 = vmatpush1.xpose.msra.mxu0 0.0
  %2356 = vmatprep.subr.mxu0 0.0
  %2357 = vmatpush1.xpose.msra.mxu0 0.0
  %2358 = vmatprep.subr.mxu0 0.0
  %2359 = vmatpush1.xpose.msra.mxu0 0.0
  %2360 = vmatprep.subr.mxu0 0.0
  %2361 = vmatpush1.xpose.msra.mxu0 0.0
  %2362 = vmatprep.subr.mxu0 0.0
  %2363 = vmatpush1.xpose.msra.mxu0 0.0
  %2364 = vmatprep.subr.mxu0 0.0
  %2365 = vmatpush1.xpose.msra.mxu0 0.0
  %2366 = vmatprep.subr.mxu0 0.0
  %2367 = vmatpush1.xpose.msra.mxu0 0.0
  %2368 = vmatprep.subr.mxu0 0.0
  %2369 = vmatpush1.xpose.msra.mxu0 0.0
  %2370 = vmatprep.subr.mxu0 0.0
  %2371 = vmatpush1.xpose.msra.mxu0 0.0
  %2372 = vmatprep.subr.mxu0 0.0
  %2373 = vmatpush1.xpose.msra.mxu0 0.0
  %2374 = vmatprep.subr.mxu0 0.0
  %2375 = vmatpush1.xpose.msra.mxu0 0.0
  %2376 = vmatprep.mubr.f32.mxu0 0.0
  %v2377 = vand.u32 %v1268, 4294901760
  %2378 = vmatmul.mubr.f32.gmra.mrb[0].mxu0 %v2377
  %v2379 = vpop.f32.mrb[0].mxu0
  %v2380 = vadd.f32 %v2214, %v2379
  %v2381 = vpop.f32.mrb[0].mxu0
  %2382 = vmatprep.mubr.f32.mxu0 0.0
  %v2383 = vand.u32 %v1271, 4294901760
  %2384 = vmatmul.mubr.f32.gmra.mrb[0].mxu0 %v2383
  %v2385 = vpop.f32.mrb[0].mxu0
  %v2386 = vadd.f32 %v2220, %v2385
  %v2387 = vpop.f32.mrb[0].mxu0
  %2388 = vmatprep.mubr.f32.mxu0 0.0
  %v2389 = vand.u32 %v1274, 4294901760
  %2390 = vmatmul.mubr.f32.gmra.mrb[0].mxu0 %v2389
  %v2391 = vpop.f32.mrb[0].mxu0
  %v2392 = vadd.f32 %v2226, %v2391
  %v2393 = vpop.f32.mrb[0].mxu0
  %2394 = vmatprep.mubr.f32.mxu0 0.0
  %v2395 = vand.u32 %v1277, 4294901760
  %2396 = vmatmul.mubr.f32.gmra.mrb[0].mxu0 %v2395
  %v2397 = vpop.f32.mrb[0].mxu0
  %v2398 = vadd.f32 %v2232, %v2397
  %v2399 = vpop.f32.mrb[0].mxu0
  %2400 = vmatprep.mubr.f32.mxu0 0.0
  %v2401 = vand.u32 %v1280, 4294901760
  %2402 = vmatmul.mubr.f32.gmra.mrb[0].mxu0 %v2401
  %v2403 = vpop.f32.mrb[0].mxu0
  %v2404 = vadd.f32 %v2238, %v2403
  %v2405 = vpop.f32.mrb[0].mxu0
  %2406 = vmatprep.mubr.f32.mxu0 0.0
  %v2407 = vand.u32 %v1283, 4294901760
  %2408 = vmatmul.mubr.f32.gmra.mrb[0].mxu0 %v2407
  %v2409 = vpop.f32.mrb[0].mxu0
  %v2410 = vadd.f32 %v2244, %v2409
  %v2411 = vpop.f32.mrb[0].mxu0
  %2412 = vmatprep.mubr.f32.mxu0 0.0
  %v2413 = vand.u32 %v1286, 4294901760
  %2414 = vmatmul.mubr.f32.gmra.mrb[0].mxu0 %v2413
  %v2415 = vpop.f32.mrb[0].mxu0
  %v2416 = vadd.f32 %v2250, %v2415
  %v2417 = vpop.f32.mrb[0].mxu0
  %2418 = vmatprep.mubr.f32.mxu0 0.0
  %v2419 = vand.u32 %v1289, 4294901760
  %2420 = vmatmul.mubr.f32.gmra.mrb[0].mxu0 %v2419
  %v2421 = vpop.f32.mrb[0].mxu0
  %v2422 = vadd.f32 %v2256, %v2421
  %v2423 = vpop.f32.mrb[0].mxu0
  %2424 = vmatprep.mubr.f32.mxu0 0.0
  %v2425 = vand.u32 %v1292, 4294901760
  %2426 = vmatmul.mubr.f32.gmra.mrb[0].mxu0 %v2425
  %v2427 = vpop.f32.mrb[0].mxu0
  %v2428 = vadd.f32 %v2262, %v2427
  %v2429 = vpop.f32.mrb[0].mxu0
  %2430 = vmatprep.mubr.f32.mxu0 0.0
  %v2431 = vand.u32 %v1295, 4294901760
  %2432 = vmatmul.mubr.f32.gmra.mrb[0].mxu0 %v2431
  %v2433 = vpop.f32.mrb[0].mxu0
  %v2434 = vadd.f32 %v2268, %v2433
  %v2435 = vpop.f32.mrb[0].mxu0
  %2436 = vmatprep.mubr.f32.mxu0 0.0
  %v2437 = vand.u32 %v1298, 4294901760
  %2438 = vmatmul.mubr.f32.gmra.mrb[0].mxu0 %v2437
  %v2439 = vpop.f32.mrb[0].mxu0
  %v2440 = vadd.f32 %v2274, %v2439
  %v2441 = vpop.f32.mrb[0].mxu0
  %2442 = vmatprep.mubr.f32.mxu0 0.0
  %v2443 = vand.u32 %v1301, 4294901760
  %2444 = vmatmul.mubr.f32.gmra.mrb[0].mxu0 %v2443
  %v2445 = vpop.f32.mrb[0].mxu0
  %v2446 = vadd.f32 %v2280, %v2445
  %v2447 = vpop.f32.mrb[0].mxu0
  %2448 = vmatprep.mubr.f32.mxu0 0.0
  %v2449 = vand.u32 %v1304, 4294901760
  %2450 = vmatmul.mubr.f32.gmra.mrb[0].mxu0 %v2449
  %v2451 = vpop.f32.mrb[0].mxu0
  %v2452 = vadd.f32 %v2286, %v2451
  %v2453 = vpop.f32.mrb[0].mxu0
  %2454 = vmatprep.mubr.f32.mxu0 0.0
  %v2455 = vand.u32 %v1307, 4294901760
  %2456 = vmatmul.mubr.f32.gmra.mrb[0].mxu0 %v2455
  %v2457 = vpop.f32.mrb[0].mxu0
  %v2458 = vadd.f32 %v2292, %v2457
  %v2459 = vpop.f32.mrb[0].mxu0
  %2460 = vmatprep.mubr.f32.mxu0 0.0
  %v2461 = vand.u32 %v1310, 4294901760
  %2462 = vmatmul.mubr.f32.gmra.mrb[0].mxu0 %v2461
  %v2463 = vpop.f32.mrb[0].mxu0
  %v2464 = vadd.f32 %v2298, %v2463
  %v2465 = vpop.f32.mrb[0].mxu0
  %2466 = vmatprep.mubr.f32.mxu0 0.0
  %v2467 = vand.u32 %v1313, 4294901760
  %2468 = vmatmul.mubr.f32.gmra.mrb[0].mxu0 %v2467
  %v2469 = vpop.f32.mrb[0].mxu0
  %v2470 = vadd.f32 %v2304, %v2469
  %v2471 = vpop.f32.mrb[0].mxu0
  %2472 = vdwg.mxu0
  %vm2473 = vcmask 326656
  %2474 = vst.msk [vmem:[%s5] sm:$0xff] %vm2473, %v2380
  %2475 = vst.msk [vmem:[%s5 + $0x8] sm:$0xff] %vm2473, %v2386
  %2476 = vst.msk [vmem:[%s5 + $0x10] sm:$0xff] %vm2473, %v2392
  %2477 = vst.msk [vmem:[%s5 + $0x18] sm:$0xff] %vm2473, %v2398
  %2478 = vst.msk [vmem:[%s5 + $0x20] sm:$0xff] %vm2473, %v2404
  %2479 = vst.msk [vmem:[%s5 + $0x28] sm:$0xff] %vm2473, %v2410
  %2480 = vst.msk [vmem:[%s5 + $0x30] sm:$0xff] %vm2473, %v2416
  %2481 = vst.msk [vmem:[%s5 + $0x38] sm:$0xff] %vm2473, %v2422
  %2482 = vst.msk [vmem:[%s5 + $0x40] sm:$0xff] %vm2473, %v2428
  %2483 = vst.msk [vmem:[%s5 + $0x48] sm:$0xff] %vm2473, %v2434
  %2484 = vst.msk [vmem:[%s5 + $0x50] sm:$0xff] %vm2473, %v2440
  %2485 = vst.msk [vmem:[%s5 + $0x58] sm:$0xff] %vm2473, %v2446
  %2486 = vst.msk [vmem:[%s5 + $0x60] sm:$0xff] %vm2473, %v2452
  %2487 = vst.msk [vmem:[%s5 + $0x68] sm:$0xff] %vm2473, %v2458
  %2488 = vst.msk [vmem:[%s5 + $0x70] sm:$0xff] %vm2473, %v2464
  %2489 = vst.msk [vmem:[%s5 + $0x78] sm:$0xff] %vm2473, %v2470
  // Predicated region
  $region22: #{tpu_custom_call.1} parent=0 // pred_check
    _
  $region23: #{tpu_custom_call.1} parent=0 // pred_check_branch
    %2491 = sbr.rel (0) target = $region25
  $region24: #{tpu_custom_call.1} parent=0 // pred_region
    _
  $region25: #{tpu_custom_call.1} parent=0 // pred_fallthru
    _
  // Predicated region
  $region26: #{tpu_custom_call.1} parent=0 // pred_check
    _
  $region27: #{tpu_custom_call.1} parent=0 // pred_check_branch
    %2493 = sbr.rel (0) target = $region29
  $region28: #{tpu_custom_call.1} parent=0 // pred_region
    _
  $region29: #{tpu_custom_call.1} parent=0 // pred_fallthru
    _

</llo_original>
